<compile_context>
chip_gen: v7x
topology: tpu7x:2x2x1
jax: 0.10.0
libtpu: 0.0.40
codegen_flags: <defaults>
</compile_context>

<pallas_src>
import functools
import math

import jax
import jax.numpy as jnp
from jax import lax
from jax.experimental import pallas as pl
from jax.experimental.pallas import tpu as pltpu

# Explicit scoped-VMEM request: safe on v5e (16 MiB default / 128 MiB phys),
# v6e (32/128) and v7x (32/64).
_VMEM_LIMIT_BYTES = 32 * 1024 * 1024


def _pick_tile(dim, target):
    """Largest divisor of `dim` that is <= target and a multiple of 8.
    Falls back to the full dim (single block) when no such divisor exists,
    which keeps the (8, 128) block-shape rule satisfied in all cases."""
    if dim <= target:
        return dim
    for t in range(target, 7, -1):
        if dim % t == 0 and t % 8 == 0:
            return t
    return dim


# ---------------------------------------------------------------------------
# Kernel 1: fused QKV input projection (row-tiled, weights resident).
# The 1/sqrt(Dh) softmax scale is folded into the Q output here.
# ---------------------------------------------------------------------------
def _qkv_proj_kernel(x_ref, wq_ref, wk_ref, wv_ref, bq_ref, bk_ref, bv_ref,
                     q_ref, k_ref, v_ref, *, scale):
    x = x_ref[...]                                     # (TM, E)
    q = jnp.dot(x, wq_ref[...], preferred_element_type=jnp.float32) + bq_ref[...]
    q_ref[...] = (q * scale).astype(q_ref.dtype)
    k_ref[...] = (jnp.dot(x, wk_ref[...], preferred_element_type=jnp.float32)
                  + bk_ref[...]).astype(k_ref.dtype)
    v_ref[...] = (jnp.dot(x, wv_ref[...], preferred_element_type=jnp.float32)
                  + bv_ref[...]).astype(v_ref.dtype)


def qkv_proj(x2d, w_in_t, b_in, *, scale, target_tile_m=256):
    m, e = x2d.shape
    tm = _pick_tile(m, target_tile_m)
    # Wrapper-side layout plumbing: w_in_t is (E, 3E); slice once per call.
    wq, wk, wv = w_in_t[:, 0:e], w_in_t[:, e:2 * e], w_in_t[:, 2 * e:3 * e]
    bq = b_in[0:e].reshape(1, e)
    bk = b_in[e:2 * e].reshape(1, e)
    bv = b_in[2 * e:3 * e].reshape(1, e)

    row_spec = pl.BlockSpec((tm, e), lambda i: (i, 0))
    w_spec = pl.BlockSpec((e, e), lambda i: (0, 0))    # resident across steps
    b_spec = pl.BlockSpec((1, e), lambda i: (0, 0))
    out = jax.ShapeDtypeStruct((m, e), x2d.dtype)

    return pl.pallas_call(
        functools.partial(_qkv_proj_kernel, scale=scale),
        grid_spec=pltpu.PrefetchScalarGridSpec(
            num_scalar_prefetch=0,
            grid=(m // tm,),
            in_specs=[row_spec, w_spec, w_spec, w_spec, b_spec, b_spec, b_spec],
            out_specs=[row_spec, row_spec, row_spec]),
        out_shape=(out, out, out),
        compiler_params=pltpu.CompilerParams(
            dimension_semantics=("parallel",),
            vmem_limit_bytes=_VMEM_LIMIT_BYTES),
    )(x2d, wq, wk, wv, bq, bk, bv)


# ---------------------------------------------------------------------------
# Kernel 2: fused flash-attention core + output projection, batch-major
# (N, L, E) layout. Heads are handled by lane-slicing the E axis inside the
# kernel; the output projection is applied at the last KV step so the
# per-head attention output never leaves VMEM.
# ---------------------------------------------------------------------------
def _attn_out_kernel(q_ref, k_ref, v_ref, wo_ref, bo_ref, o_ref,
                     m_sc, l_sc, acc_sc, *, n_head):
    ki = pl.program_id(2)
    e = q_ref.shape[2]
    dh = e // n_head

    @pl.when(ki == 0)
    def _init():
        m_sc[...] = jnp.full(m_sc.shape, -jnp.inf, dtype=m_sc.dtype)
        l_sc[...] = jnp.zeros(l_sc.shape, dtype=l_sc.dtype)
        acc_sc[...] = jnp.zeros(acc_sc.shape, dtype=acc_sc.dtype)

    q = q_ref[0]                                       # (TQ, E), pre-scaled
    k = k_ref[0]                                       # (TK, E)
    v = v_ref[0]                                       # (TK, E)

    for h in range(n_head):                            # statically unrolled
        sl = slice(h * dh, (h + 1) * dh)
        qh, kh, vh = q[:, sl], k[:, sl], v[:, sl]
        # q @ k^T without an explicit transpose: contract the last dims (NT).
        s = lax.dot_general(qh, kh, (((1,), (1,)), ((), ())),
                            preferred_element_type=jnp.float32)
        m_prev = m_sc[h]                               # (TQ, 1)
        l_prev = l_sc[h]
        m_new = jnp.maximum(m_prev, jnp.max(s, axis=-1, keepdims=True))
        alpha = jnp.exp(m_prev - m_new)
        p = jnp.exp(s - m_new)
        l_sc[h] = alpha * l_prev + jnp.sum(p, axis=-1, keepdims=True)
        acc_sc[h] = alpha * acc_sc[h] + jnp.dot(
            p.astype(vh.dtype), vh, preferred_element_type=jnp.float32)
        m_sc[h] = m_new

    @pl.when(ki == pl.num_programs(2) - 1)
    def _finalize():
        heads = []
        for h in range(n_head):
            inv_l = pl.reciprocal(l_sc[h], approx=True)     # EUP, ~free
            heads.append(acc_sc[h] * inv_l)
        attn_out = jnp.concatenate(heads, axis=-1)          # (TQ, E), f32
        y = jnp.dot(attn_out.astype(wo_ref.dtype), wo_ref[...],
                    preferred_element_type=jnp.float32) + bo_ref[...]
        o_ref[0] = y.astype(o_ref.dtype)


def attn_out_fused(q, k, v, w_out_t, b_out, n_head, *, out_dtype,
                   target_tile_q=128, target_tile_k=128):
    n, seq, e = q.shape
    dh = e // n_head
    tq = _pick_tile(seq, target_tile_q)
    tk = _pick_tile(seq, target_tile_k)

    q_spec = pl.BlockSpec((1, tq, e), lambda b, qi, ki: (b, qi, 0))
    kv_spec = pl.BlockSpec((1, tk, e), lambda b, qi, ki: (b, ki, 0))
    wo_spec = pl.BlockSpec((e, e), lambda b, qi, ki: (0, 0))   # resident
    bo_spec = pl.BlockSpec((1, e), lambda b, qi, ki: (0, 0))

    return pl.pallas_call(
        functools.partial(_attn_out_kernel, n_head=n_head),
        grid_spec=pltpu.PrefetchScalarGridSpec(
            num_scalar_prefetch=0,
            grid=(n, seq // tq, seq // tk),
            in_specs=[q_spec, kv_spec, kv_spec, wo_spec, bo_spec],
            out_specs=q_spec,
            scratch_shapes=[pltpu.VMEM((n_head, tq, 1), jnp.float32),    # m
                            pltpu.VMEM((n_head, tq, 1), jnp.float32),    # l
                            pltpu.VMEM((n_head, tq, dh), jnp.float32)]),  # acc
        out_shape=jax.ShapeDtypeStruct((n, seq, e), out_dtype),
        compiler_params=pltpu.CompilerParams(
            dimension_semantics=("parallel", "parallel", "arbitrary"),
            vmem_limit_bytes=_VMEM_LIMIT_BYTES),
    )(q, k, v, w_out_t, b_out.reshape(1, e))


# ---------------------------------------------------------------------------
# AttentionLayer.forward equivalent (need_weights=False, attn_mask=None path)
# ---------------------------------------------------------------------------
def attention_layer_forward(x, params, n_head, *, compute_dtype=None):
    """x: (L, N, E) — PyTorch nn.MultiheadAttention default layout."""
    L, N, E = x.shape
    assert E % n_head == 0, "d_model must be divisible by n_head"
    out_dtype = x.dtype
    dh = E // n_head
    scale = 1.0 / math.sqrt(dh)

    w_in = params["in_proj_weight"]      # (3E, E)
    b_in = params["in_proj_bias"]        # (3E,)
    w_out = params["out_proj_weight"]    # (E, E)
    b_out = params["out_proj_bias"]      # (E,)

    if compute_dtype is not None:
        x = x.astype(compute_dtype)
        w_in = w_in.astype(compute_dtype)
        w_out = w_out.astype(compute_dtype)
        # biases stay f32: they are added after f32 MXU accumulation.

    # One-time layout plumbing: batch-major activations + pre-transposed
    # weights so no kernel ever transposes or reshuffles heads.
    x_nle = jnp.transpose(x, (1, 0, 2))                # (N, L, E)
    x2d = x_nle.reshape(N * L, E)

    q2d, k2d, v2d = qkv_proj(x2d, w_in.T, b_in, scale=scale)   # each (N*L, E)

    # Free reshapes: head split/merge happens via lane slices inside the kernel.
    qh = q2d.reshape(N, L, E)
    kh = k2d.reshape(N, L, E)
    vh = v2d.reshape(N, L, E)

    y_nle = attn_out_fused(qh, kh, vh, w_out.T, b_out, n_head,
                           out_dtype=out_dtype)        # (N, L, E)
    return jnp.transpose(y_nle, (1, 0, 2))             # back to (L, N, E)


# ---------------------------------------------------------------------------
# Pure-JAX reference (mirrors torch.nn.MultiheadAttention forward)
# ---------------------------------------------------------------------------
def reference_forward(x, params, n_head):
    L, N, E = x.shape
    Dh = E // n_head
    x2d = x.reshape(L * N, E)
    qkv = x2d @ params["in_proj_weight"].T + params["in_proj_bias"]
    q, k, v = jnp.split(qkv, 3, axis=-1)

    def split_heads(t2d):
        t = t2d.reshape(L, N, n_head, Dh)
        return jnp.transpose(t, (1, 2, 0, 3)).reshape(N * n_head, L, Dh)

    qh, kh, vh = map(split_heads, (q, k, v))
    s = jnp.einsum("bld,bmd->blm", qh, kh) / math.sqrt(Dh)
    p = jax.nn.softmax(s, axis=-1)
    oh = jnp.einsum("blm,bmd->bld", p, vh)
    o = oh.reshape(N, n_head, L, Dh)
    o = jnp.transpose(o, (2, 0, 1, 3)).reshape(L * N, E)
    y = o @ params["out_proj_weight"].T + params["out_proj_bias"]
    return y.reshape(L, N, E)


# ---------------------------------------------------------------------------
def init_params(key, d_model):
    k1, k2, k3, k4 = jax.random.split(key, 4)
    bound = 1.0 / math.sqrt(d_model)
    return {
        "in_proj_weight": jax.random.uniform(
            k1, (3 * d_model, d_model), jnp.float32, -bound, bound),
        "in_proj_bias": jax.random.uniform(
            k2, (3 * d_model,), jnp.float32, -bound, bound),
        "out_proj_weight": jax.random.uniform(
            k3, (d_model, d_model), jnp.float32, -bound, bound),
        "out_proj_bias": jax.random.uniform(
            k4, (d_model,), jnp.float32, -bound, bound),
    }


if __name__ == "__main__":
    key = jax.random.PRNGKey(0)

    # --- Test 1: small shapes, single KV tile, f32 + bf16 compute paths ---
    d_model, n_head = 32, 4
    seq_len, batch = 8, 2
    kx, kp, key = jax.random.split(key, 3)
    x = jax.random.normal(kx, (seq_len, batch, d_model), jnp.float32)
    params = init_params(kp, d_model)
    y_ref = reference_forward(x, params, n_head)

    fwd_f32 = jax.jit(functools.partial(attention_layer_forward, n_head=n_head))
    y = jax.block_until_ready(fwd_f32(x, params))
    assert y.shape == (seq_len, batch, d_model)
    assert jnp.allclose(y, y_ref, atol=5e-3, rtol=5e-3), "f32 mismatch vs reference"

    fwd_bf16 = jax.jit(functools.partial(attention_layer_forward, n_head=n_head,
                                         compute_dtype=jnp.bfloat16))
    y16 = jax.block_until_ready(fwd_bf16(x, params))
    assert jnp.allclose(y16.astype(jnp.float32), y_ref, atol=1e-1, rtol=1e-1), \
        "bf16 mismatch vs reference"

    # --- Test 2: larger shapes exercising multi-tile flash accumulation ---
    d_model2, n_head2 = 128, 8
    seq_len2, batch2 = 256, 2
    kx2, kp2 = jax.random.split(key)
    x2 = jax.random.normal(kx2, (seq_len2, batch2, d_model2), jnp.float32)
    params2 = init_params(kp2, d_model2)
    y2_ref = reference_forward(x2, params2, n_head2)

    fwd2 = jax.jit(functools.partial(attention_layer_forward, n_head=n_head2))
    y2 = jax.block_until_ready(fwd2(x2, params2))
    assert y2.shape == (seq_len2, batch2, d_model2)
    assert jnp.allclose(y2, y2_ref, atol=1e-2, rtol=1e-2), \
        "f32 (tiled) mismatch vs reference"

    print("KERNEL_OK")
</pallas_src>

<mosaic_0001>
module attributes {stable_mosaic.version = 11 : i64} {
  func.func @_qkv_proj_kernel(%arg0: i32, %arg1: memref<16x32xf32, #tpu.memory_space<vmem>>, %arg2: memref<32x32xf32, #tpu.memory_space<vmem>>, %arg3: memref<32x32xf32, #tpu.memory_space<vmem>>, %arg4: memref<32x32xf32, #tpu.memory_space<vmem>>, %arg5: memref<1x32xf32, #tpu.memory_space<vmem>>, %arg6: memref<1x32xf32, #tpu.memory_space<vmem>>, %arg7: memref<1x32xf32, #tpu.memory_space<vmem>>, %arg8: memref<16x32xf32, #tpu.memory_space<vmem>>, %arg9: memref<16x32xf32, #tpu.memory_space<vmem>>, %arg10: memref<16x32xf32, #tpu.memory_space<vmem>>) attributes {dimension_semantics = [#tpu.dimension_semantics<parallel>], iteration_bounds = array<i64: 1>, scalar_prefetch = 0 : i64, scratch_operands = 0 : i64, tpu.core_type = #tpu.core_type<tc>, window_params = [{transform_indices = @transform_0, window_bounds = array<i64: 16, 32>}, {pipeline_mode = #tpu.pipeline_mode<synchronous>, transform_indices = @transform_1, window_bounds = array<i64: 32, 32>}, {pipeline_mode = #tpu.pipeline_mode<synchronous>, transform_indices = @transform_2, window_bounds = array<i64: 32, 32>}, {pipeline_mode = #tpu.pipeline_mode<synchronous>, transform_indices = @transform_3, window_bounds = array<i64: 32, 32>}, {pipeline_mode = #tpu.pipeline_mode<synchronous>, transform_indices = @transform_4, window_bounds = array<i64: 1, 32>}, {pipeline_mode = #tpu.pipeline_mode<synchronous>, transform_indices = @transform_5, window_bounds = array<i64: 1, 32>}, {pipeline_mode = #tpu.pipeline_mode<synchronous>, transform_indices = @transform_6, window_bounds = array<i64: 1, 32>}, {transform_indices = @transform_7, window_bounds = array<i64: 16, 32>}, {transform_indices = @transform_8, window_bounds = array<i64: 16, 32>}, {transform_indices = @transform_9, window_bounds = array<i64: 16, 32>}]} {
    %c0 = arith.constant 0 : index
    %c0_0 = arith.constant 0 : index
    %0 = vector.load %arg1[%c0, %c0_0] : memref<16x32xf32, #tpu.memory_space<vmem>>, vector<16x32xf32>
    %c0_1 = arith.constant 0 : index
    %c0_2 = arith.constant 0 : index
    %1 = vector.load %arg2[%c0_1, %c0_2] : memref<32x32xf32, #tpu.memory_space<vmem>>, vector<32x32xf32>
    %cst = arith.constant dense<0.000000e+00> : vector<16x32xf32>
    %2 = tpu.matmul %0, %1, %cst {dimension_numbers = #tpu.dot_dimension_numbers<[1], [0], [0], [1], [0, 0, 1, 1], [], []>} : vector<16x32xf32>, vector<32x32xf32>, vector<16x32xf32> -> vector<16x32xf32>
    %c0_3 = arith.constant 0 : index
    %c0_4 = arith.constant 0 : index
    %3 = vector.load %arg5[%c0_3, %c0_4] : memref<1x32xf32, #tpu.memory_space<vmem>>, vector<1x32xf32>
    %4 = vector.broadcast %3 : vector<1x32xf32> to vector<16x32xf32>
    %5 = arith.addf %2, %4 : vector<16x32xf32>
    %cst_5 = arith.constant 0.353553385 : f32
    %6 = vector.broadcast %cst_5 : f32 to vector<16x32xf32>
    %7 = arith.mulf %5, %6 : vector<16x32xf32>
    %c0_6 = arith.constant 0 : index
    %c0_7 = arith.constant 0 : index
    %8 = vector.load %arg8[%c0_6, %c0_7] : memref<16x32xf32, #tpu.memory_space<vmem>>, vector<16x32xf32>
    tpu.vector_store %arg8[%c0_6, %c0_7], %7 {strides = array<i32>} : memref<16x32xf32, #tpu.memory_space<vmem>>, vector<16x32xf32>,
    %c0_8 = arith.constant 0 : index
    %c0_9 = arith.constant 0 : index
    %9 = vector.load %arg3[%c0_8, %c0_9] : memref<32x32xf32, #tpu.memory_space<vmem>>, vector<32x32xf32>
    %cst_10 = arith.constant dense<0.000000e+00> : vector<16x32xf32>
    %10 = tpu.matmul %0, %9, %cst_10 {dimension_numbers = #tpu.dot_dimension_numbers<[1], [0], [0], [1], [0, 0, 1, 1], [], []>} : vector<16x32xf32>, vector<32x32xf32>, vector<16x32xf32> -> vector<16x32xf32>
    %c0_11 = arith.constant 0 : index
    %c0_12 = arith.constant 0 : index
    %11 = vector.load %arg6[%c0_11, %c0_12] : memref<1x32xf32, #tpu.memory_space<vmem>>, vector<1x32xf32>
    %12 = vector.broadcast %11 : vector<1x32xf32> to vector<16x32xf32>
    %13 = arith.addf %10, %12 : vector<16x32xf32>
    %c0_13 = arith.constant 0 : index
    %c0_14 = arith.constant 0 : index
    %14 = vector.load %arg9[%c0_13, %c0_14] : memref<16x32xf32, #tpu.memory_space<vmem>>, vector<16x32xf32>
    tpu.vector_store %arg9[%c0_13, %c0_14], %13 {strides = array<i32>} : memref<16x32xf32, #tpu.memory_space<vmem>>, vector<16x32xf32>,
    %c0_15 = arith.constant 0 : index
    %c0_16 = arith.constant 0 : index
    %15 = vector.load %arg4[%c0_15, %c0_16] : memref<32x32xf32, #tpu.memory_space<vmem>>, vector<32x32xf32>
    %cst_17 = arith.constant dense<0.000000e+00> : vector<16x32xf32>
    %16 = tpu.matmul %0, %15, %cst_17 {dimension_numbers = #tpu.dot_dimension_numbers<[1], [0], [0], [1], [0, 0, 1, 1], [], []>} : vector<16x32xf32>, vector<32x32xf32>, vector<16x32xf32> -> vector<16x32xf32>
    %c0_18 = arith.constant 0 : index
    %c0_19 = arith.constant 0 : index
    %17 = vector.load %arg7[%c0_18, %c0_19] : memref<1x32xf32, #tpu.memory_space<vmem>>, vector<1x32xf32>
    %18 = vector.broadcast %17 : vector<1x32xf32> to vector<16x32xf32>
    %19 = arith.addf %16, %18 : vector<16x32xf32>
    %c0_20 = arith.constant 0 : index
    %c0_21 = arith.constant 0 : index
    %20 = vector.load %arg10[%c0_20, %c0_21] : memref<16x32xf32, #tpu.memory_space<vmem>>, vector<16x32xf32>
    tpu.vector_store %arg10[%c0_20, %c0_21], %19 {strides = array<i32>} : memref<16x32xf32, #tpu.memory_space<vmem>>, vector<16x32xf32>,
    return
  }
  func.func @transform_0(%arg0: i32) -> (i32, i32) {
    %c0_i32 = arith.constant 0 : i32
    %c0_i32_0 = arith.constant 0 : i32
    return %arg0, %c0_i32 : i32, i32
  }
  func.func @transform_1(%arg0: i32) -> (i32, i32) {
    %c0_i32 = arith.constant 0 : i32
    %c0_i32_0 = arith.constant 0 : i32
    %c0_i32_1 = arith.constant 0 : i32
    return %c0_i32, %c0_i32_0 : i32, i32
  }
  func.func @transform_2(%arg0: i32) -> (i32, i32) {
    %c0_i32 = arith.constant 0 : i32
    %c0_i32_0 = arith.constant 0 : i32
    %c0_i32_1 = arith.constant 0 : i32
    return %c0_i32, %c0_i32_0 : i32, i32
  }
  func.func @transform_3(%arg0: i32) -> (i32, i32) {
    %c0_i32 = arith.constant 0 : i32
    %c0_i32_0 = arith.constant 0 : i32
    %c0_i32_1 = arith.constant 0 : i32
    return %c0_i32, %c0_i32_0 : i32, i32
  }
  func.func @transform_4(%arg0: i32) -> (i32, i32) {
    %c0_i32 = arith.constant 0 : i32
    %c0_i32_0 = arith.constant 0 : i32
    %c0_i32_1 = arith.constant 0 : i32
    return %c0_i32, %c0_i32_0 : i32, i32
  }
  func.func @transform_5(%arg0: i32) -> (i32, i32) {
    %c0_i32 = arith.constant 0 : i32
    %c0_i32_0 = arith.constant 0 : i32
    %c0_i32_1 = arith.constant 0 : i32
    return %c0_i32, %c0_i32_0 : i32, i32
  }
  func.func @transform_6(%arg0: i32) -> (i32, i32) {
    %c0_i32 = arith.constant 0 : i32
    %c0_i32_0 = arith.constant 0 : i32
    %c0_i32_1 = arith.constant 0 : i32
    return %c0_i32, %c0_i32_0 : i32, i32
  }
  func.func @transform_7(%arg0: i32) -> (i32, i32) {
    %c0_i32 = arith.constant 0 : i32
    %c0_i32_0 = arith.constant 0 : i32
    return %arg0, %c0_i32 : i32, i32
  }
  func.func @transform_8(%arg0: i32) -> (i32, i32) {
    %c0_i32 = arith.constant 0 : i32
    %c0_i32_0 = arith.constant 0 : i32
    return %arg0, %c0_i32 : i32, i32
  }
  func.func @transform_9(%arg0: i32) -> (i32, i32) {
    %c0_i32 = arith.constant 0 : i32
    %c0_i32_0 = arith.constant 0 : i32
    return %arg0, %c0_i32 : i32, i32
  }
}

module attributes {stable_mosaic.version = 11 : i64} {
  func.func @_attn_out_kernel(%arg0: i32, %arg1: i32, %arg2: i32, %arg3: memref<1x8x32xf32, #tpu.memory_space<vmem>>, %arg4: memref<1x8x32xf32, #tpu.memory_space<vmem>>, %arg5: memref<1x8x32xf32, #tpu.memory_space<vmem>>, %arg6: memref<32x32xf32, #tpu.memory_space<vmem>>, %arg7: memref<1x32xf32, #tpu.memory_space<vmem>>, %arg8: memref<1x8x32xf32, #tpu.memory_space<vmem>>, %arg9: memref<4x8x1xf32, #tpu.memory_space<vmem>>, %arg10: memref<4x8x1xf32, #tpu.memory_space<vmem>>, %arg11: memref<4x8x8xf32, #tpu.memory_space<vmem>>) attributes {dimension_semantics = [#tpu.dimension_semantics<parallel>, #tpu.dimension_semantics<parallel>, #tpu.dimension_semantics<arbitrary>], iteration_bounds = array<i64: 2, 1, 1>, scalar_prefetch = 0 : i64, scratch_operands = 3 : i64, tpu.core_type = #tpu.core_type<tc>, window_params = [{transform_indices = @transform_0, window_bounds = array<i64: 1, 8, 32>}, {transform_indices = @transform_1, window_bounds = array<i64: 1, 8, 32>}, {transform_indices = @transform_2, window_bounds = array<i64: 1, 8, 32>}, {pipeline_mode = #tpu.pipeline_mode<synchronous>, transform_indices = @transform_3, window_bounds = array<i64: 32, 32>}, {pipeline_mode = #tpu.pipeline_mode<synchronous>, transform_indices = @transform_4, window_bounds = array<i64: 1, 32>}, {transform_indices = @transform_5, window_bounds = array<i64: 1, 8, 32>}]} {
    %c0_i32 = arith.constant 0 : i32
    %0 = arith.cmpi eq, %arg2, %c0_i32 : i32
    %1 = arith.extui %0 : i1 to i32
    %c0_i32_0 = arith.constant 0 : i32
    %2 = arith.cmpi ne, %1, %c0_i32_0 : i32
    scf.if %2 {
      %cst_95 = arith.constant 0xFF800000 : f32
      %152 = vector.broadcast %cst_95 : f32 to vector<4x8x1xf32>
      %c0_96 = arith.constant 0 : index
      %c0_97 = arith.constant 0 : index
      %c0_98 = arith.constant 0 : index
      %153 = vector.load %arg9[%c0_96, %c0_97, %c0_98] : memref<4x8x1xf32, #tpu.memory_space<vmem>>, vector<4x8x1xf32>
      tpu.vector_store %arg9[%c0_96, %c0_97, %c0_98], %152 {strides = array<i32>} : memref<4x8x1xf32, #tpu.memory_space<vmem>>, vector<4x8x1xf32>,
      %cst_99 = arith.constant 0.000000e+00 : f32
      %154 = vector.broadcast %cst_99 : f32 to vector<4x8x1xf32>
      %c0_100 = arith.constant 0 : index
      %c0_101 = arith.constant 0 : index
      %c0_102 = arith.constant 0 : index
      %155 = vector.load %arg10[%c0_100, %c0_101, %c0_102] : memref<4x8x1xf32, #tpu.memory_space<vmem>>, vector<4x8x1xf32>
      tpu.vector_store %arg10[%c0_100, %c0_101, %c0_102], %154 {strides = array<i32>} : memref<4x8x1xf32, #tpu.memory_space<vmem>>, vector<4x8x1xf32>,
      %cst_103 = arith.constant 0.000000e+00 : f32
      %156 = vector.broadcast %cst_103 : f32 to vector<4x8x8xf32>
      %c0_104 = arith.constant 0 : index
      %c0_105 = arith.constant 0 : index
      %c0_106 = arith.constant 0 : index
      %157 = vector.load %arg11[%c0_104, %c0_105, %c0_106] : memref<4x8x8xf32, #tpu.memory_space<vmem>>, vector<4x8x8xf32>
      tpu.vector_store %arg11[%c0_104, %c0_105, %c0_106], %156 {strides = array<i32>} : memref<4x8x8xf32, #tpu.memory_space<vmem>>, vector<4x8x8xf32>,
    } else {
    }
    %c0 = arith.constant 0 : index
    %c0_1 = arith.constant 0 : index
    %c0_2 = arith.constant 0 : index
    %3 = vector.load %arg3[%c0, %c0_1, %c0_2] : memref<1x8x32xf32, #tpu.memory_space<vmem>>, vector<1x8x32xf32>
    %4 = vector.shape_cast %3 : vector<1x8x32xf32> to vector<8x32xf32>
    %c0_3 = arith.constant 0 : index
    %c0_4 = arith.constant 0 : index
    %c0_5 = arith.constant 0 : index
    %5 = vector.load %arg4[%c0_3, %c0_4, %c0_5] : memref<1x8x32xf32, #tpu.memory_space<vmem>>, vector<1x8x32xf32>
    %6 = vector.shape_cast %5 : vector<1x8x32xf32> to vector<8x32xf32>
    %c0_6 = arith.constant 0 : index
    %c0_7 = arith.constant 0 : index
    %c0_8 = arith.constant 0 : index
    %7 = vector.load %arg5[%c0_6, %c0_7, %c0_8] : memref<1x8x32xf32, #tpu.memory_space<vmem>>, vector<1x8x32xf32>
    %8 = vector.shape_cast %7 : vector<1x8x32xf32> to vector<8x32xf32>
    %9 = vector.extract_strided_slice %4 {offsets = [0, 0], sizes = [8, 8], strides = [1, 1]} : vector<8x32xf32> to vector<8x8xf32>
    %10 = vector.extract_strided_slice %6 {offsets = [0, 0], sizes = [8, 8], strides = [1, 1]} : vector<8x32xf32> to vector<8x8xf32>
    %11 = vector.extract_strided_slice %8 {offsets = [0, 0], sizes = [8, 8], strides = [1, 1]} : vector<8x32xf32> to vector<8x8xf32>
    %cst = arith.constant dense<0.000000e+00> : vector<8x8xf32>
    %12 = tpu.matmul %9, %10, %cst {dimension_numbers = #tpu.dot_dimension_numbers<[1], [1], [0], [0], [0, 0, 1, 0], [], []>} : vector<8x8xf32>, vector<8x8xf32>, vector<8x8xf32> -> vector<8x8xf32>
    %c0_9 = arith.constant 0 : index
    %c0_10 = arith.constant 0 : index
    %c0_11 = arith.constant 0 : index
    %13 = vector.load %arg9[%c0_9, %c0_10, %c0_11] : memref<4x8x1xf32, #tpu.memory_space<vmem>>, vector<1x8x1xf32>
    %14 = vector.shape_cast %13 : vector<1x8x1xf32> to vector<8x1xf32>
    %c0_12 = arith.constant 0 : index
    %c0_13 = arith.constant 0 : index
    %c0_14 = arith.constant 0 : index
    %15 = vector.load %arg10[%c0_12, %c0_13, %c0_14] : memref<4x8x1xf32, #tpu.memory_space<vmem>>, vector<1x8x1xf32>
    %16 = vector.shape_cast %15 : vector<1x8x1xf32> to vector<8x1xf32>
    %cst_15 = arith.constant dense<0xFF800000> : vector<8xf32>
    %17 = vector.multi_reduction <maximumf>, %12, %cst_15 [1] : vector<8x8xf32> to vector<8xf32>
    %18 = vector.shape_cast %17 : vector<8xf32> to vector<8x1xf32>
    %19 = arith.maximumf %14, %18 : vector<8x1xf32>
    %20 = arith.subf %14, %19 : vector<8x1xf32>
    %21 = math.exp %20 : vector<8x1xf32>
    %22 = vector.broadcast %19 : vector<8x1xf32> to vector<8x8xf32>
    %23 = arith.subf %12, %22 : vector<8x8xf32>
    %24 = math.exp %23 : vector<8x8xf32>
    %25 = arith.mulf %21, %16 : vector<8x1xf32>
    %cst_16 = arith.constant dense<0.000000e+00> : vector<8xf32>
    %26 = vector.multi_reduction <add>, %24, %cst_16 [1] : vector<8x8xf32> to vector<8xf32>
    %27 = vector.shape_cast %26 : vector<8xf32> to vector<8x1xf32>
    %28 = arith.addf %25, %27 : vector<8x1xf32>
    %c0_17 = arith.constant 0 : index
    %c0_18 = arith.constant 0 : index
    %c0_19 = arith.constant 0 : index
    %29 = vector.load %arg10[%c0_17, %c0_18, %c0_19] : memref<4x8x1xf32, #tpu.memory_space<vmem>>, vector<1x8x1xf32>
    %30 = vector.shape_cast %29 : vector<1x8x1xf32> to vector<8x1xf32>
    %31 = vector.shape_cast %28 : vector<8x1xf32> to vector<1x8x1xf32>
    tpu.vector_store %arg10[%c0_17, %c0_18, %c0_19], %31 {strides = array<i32>} : memref<4x8x1xf32, #tpu.memory_space<vmem>>, vector<1x8x1xf32>,
    %c0_20 = arith.constant 0 : index
    %c0_21 = arith.constant 0 : index
    %c0_22 = arith.constant 0 : index
    %32 = vector.load %arg11[%c0_20, %c0_21, %c0_22] : memref<4x8x8xf32, #tpu.memory_space<vmem>>, vector<1x8x8xf32>
    %33 = vector.shape_cast %32 : vector<1x8x8xf32> to vector<8x8xf32>
    %34 = vector.broadcast %21 : vector<8x1xf32> to vector<8x8xf32>
    %35 = arith.mulf %34, %33 : vector<8x8xf32>
    %cst_23 = arith.constant dense<0.000000e+00> : vector<8x8xf32>
    %36 = tpu.matmul %24, %11, %cst_23 {dimension_numbers = #tpu.dot_dimension_numbers<[1], [0], [0], [1], [0, 0, 1, 1], [], []>} : vector<8x8xf32>, vector<8x8xf32>, vector<8x8xf32> -> vector<8x8xf32>
    %37 = arith.addf %35, %36 : vector<8x8xf32>
    %c0_24 = arith.constant 0 : index
    %c0_25 = arith.constant 0 : index
    %c0_26 = arith.constant 0 : index
    %38 = vector.load %arg11[%c0_24, %c0_25, %c0_26] : memref<4x8x8xf32, #tpu.memory_space<vmem>>, vector<1x8x8xf32>
    %39 = vector.shape_cast %38 : vector<1x8x8xf32> to vector<8x8xf32>
    %40 = vector.shape_cast %37 : vector<8x8xf32> to vector<1x8x8xf32>
    tpu.vector_store %arg11[%c0_24, %c0_25, %c0_26], %40 {strides = array<i32>} : memref<4x8x8xf32, #tpu.memory_space<vmem>>, vector<1x8x8xf32>,
    %c0_27 = arith.constant 0 : index
    %c0_28 = arith.constant 0 : index
    %c0_29 = arith.constant 0 : index
    %41 = vector.load %arg9[%c0_27, %c0_28, %c0_29] : memref<4x8x1xf32, #tpu.memory_space<vmem>>, vector<1x8x1xf32>
    %42 = vector.shape_cast %41 : vector<1x8x1xf32> to vector<8x1xf32>
    %43 = vector.shape_cast %19 : vector<8x1xf32> to vector<1x8x1xf32>
    tpu.vector_store %arg9[%c0_27, %c0_28, %c0_29], %43 {strides = array<i32>} : memref<4x8x1xf32, #tpu.memory_space<vmem>>, vector<1x8x1xf32>,
    %44 = vector.extract_strided_slice %4 {offsets = [0, 8], sizes = [8, 8], strides = [1, 1]} : vector<8x32xf32> to vector<8x8xf32>
    %45 = vector.extract_strided_slice %6 {offsets = [0, 8], sizes = [8, 8], strides = [1, 1]} : vector<8x32xf32> to vector<8x8xf32>
    %46 = vector.extract_strided_slice %8 {offsets = [0, 8], sizes = [8, 8], strides = [1, 1]} : vector<8x32xf32> to vector<8x8xf32>
    %cst_30 = arith.constant dense<0.000000e+00> : vector<8x8xf32>
    %47 = tpu.matmul %44, %45, %cst_30 {dimension_numbers = #tpu.dot_dimension_numbers<[1], [1], [0], [0], [0, 0, 1, 0], [], []>} : vector<8x8xf32>, vector<8x8xf32>, vector<8x8xf32> -> vector<8x8xf32>
    %c1 = arith.constant 1 : index
    %c0_31 = arith.constant 0 : index
    %c0_32 = arith.constant 0 : index
    %48 = vector.load %arg9[%c1, %c0_31, %c0_32] : memref<4x8x1xf32, #tpu.memory_space<vmem>>, vector<1x8x1xf32>
    %49 = vector.shape_cast %48 : vector<1x8x1xf32> to vector<8x1xf32>
    %c1_33 = arith.constant 1 : index
    %c0_34 = arith.constant 0 : index
    %c0_35 = arith.constant 0 : index
    %50 = vector.load %arg10[%c1_33, %c0_34, %c0_35] : memref<4x8x1xf32, #tpu.memory_space<vmem>>, vector<1x8x1xf32>
    %51 = vector.shape_cast %50 : vector<1x8x1xf32> to vector<8x1xf32>
    %cst_36 = arith.constant dense<0xFF800000> : vector<8xf32>
    %52 = vector.multi_reduction <maximumf>, %47, %cst_36 [1] : vector<8x8xf32> to vector<8xf32>
    %53 = vector.shape_cast %52 : vector<8xf32> to vector<8x1xf32>
    %54 = arith.maximumf %49, %53 : vector<8x1xf32>
    %55 = arith.subf %49, %54 : vector<8x1xf32>
    %56 = math.exp %55 : vector<8x1xf32>
    %57 = vector.broadcast %54 : vector<8x1xf32> to vector<8x8xf32>
    %58 = arith.subf %47, %57 : vector<8x8xf32>
    %59 = math.exp %58 : vector<8x8xf32>
    %60 = arith.mulf %56, %51 : vector<8x1xf32>
    %cst_37 = arith.constant dense<0.000000e+00> : vector<8xf32>
    %61 = vector.multi_reduction <add>, %59, %cst_37 [1] : vector<8x8xf32> to vector<8xf32>
    %62 = vector.shape_cast %61 : vector<8xf32> to vector<8x1xf32>
    %63 = arith.addf %60, %62 : vector<8x1xf32>
    %c1_38 = arith.constant 1 : index
    %c0_39 = arith.constant 0 : index
    %c0_40 = arith.constant 0 : index
    %64 = vector.load %arg10[%c1_38, %c0_39, %c0_40] : memref<4x8x1xf32, #tpu.memory_space<vmem>>, vector<1x8x1xf32>
    %65 = vector.shape_cast %64 : vector<1x8x1xf32> to vector<8x1xf32>
    %66 = vector.shape_cast %63 : vector<8x1xf32> to vector<1x8x1xf32>
    tpu.vector_store %arg10[%c1_38, %c0_39, %c0_40], %66 {strides = array<i32>} : memref<4x8x1xf32, #tpu.memory_space<vmem>>, vector<1x8x1xf32>,
    %c1_41 = arith.constant 1 : index
    %c0_42 = arith.constant 0 : index
    %c0_43 = arith.constant 0 : index
    %67 = vector.load %arg11[%c1_41, %c0_42, %c0_43] : memref<4x8x8xf32, #tpu.memory_space<vmem>>, vector<1x8x8xf32>
    %68 = vector.shape_cast %67 : vector<1x8x8xf32> to vector<8x8xf32>
    %69 = vector.broadcast %56 : vector<8x1xf32> to vector<8x8xf32>
    %70 = arith.mulf %69, %68 : vector<8x8xf32>
    %cst_44 = arith.constant dense<0.000000e+00> : vector<8x8xf32>
    %71 = tpu.matmul %59, %46, %cst_44 {dimension_numbers = #tpu.dot_dimension_numbers<[1], [0], [0], [1], [0, 0, 1, 1], [], []>} : vector<8x8xf32>, vector<8x8xf32>, vector<8x8xf32> -> vector<8x8xf32>
    %72 = arith.addf %70, %71 : vector<8x8xf32>
    %c1_45 = arith.constant 1 : index
    %c0_46 = arith.constant 0 : index
    %c0_47 = arith.constant 0 : index
    %73 = vector.load %arg11[%c1_45, %c0_46, %c0_47] : memref<4x8x8xf32, #tpu.memory_space<vmem>>, vector<1x8x8xf32>
    %74 = vector.shape_cast %73 : vector<1x8x8xf32> to vector<8x8xf32>
    %75 = vector.shape_cast %72 : vector<8x8xf32> to vector<1x8x8xf32>
    tpu.vector_store %arg11[%c1_45, %c0_46, %c0_47], %75 {strides = array<i32>} : memref<4x8x8xf32, #tpu.memory_space<vmem>>, vector<1x8x8xf32>,
    %c1_48 = arith.constant 1 : index
    %c0_49 = arith.constant 0 : index
    %c0_50 = arith.constant 0 : index
    %76 = vector.load %arg9[%c1_48, %c0_49, %c0_50] : memref<4x8x1xf32, #tpu.memory_space<vmem>>, vector<1x8x1xf32>
    %77 = vector.shape_cast %76 : vector<1x8x1xf32> to vector<8x1xf32>
    %78 = vector.shape_cast %54 : vector<8x1xf32> to vector<1x8x1xf32>
    tpu.vector_store %arg9[%c1_48, %c0_49, %c0_50], %78 {strides = array<i32>} : memref<4x8x1xf32, #tpu.memory_space<vmem>>, vector<1x8x1xf32>,
    %79 = vector.extract_strided_slice %4 {offsets = [0, 16], sizes = [8, 8], strides = [1, 1]} : vector<8x32xf32> to vector<8x8xf32>
    %80 = vector.extract_strided_slice %6 {offsets = [0, 16], sizes = [8, 8], strides = [1, 1]} : vector<8x32xf32> to vector<8x8xf32>
    %81 = vector.extract_strided_slice %8 {offsets = [0, 16], sizes = [8, 8], strides = [1, 1]} : vector<8x32xf32> to vector<8x8xf32>
    %cst_51 = arith.constant dense<0.000000e+00> : vector<8x8xf32>
    %82 = tpu.matmul %79, %80, %cst_51 {dimension_numbers = #tpu.dot_dimension_numbers<[1], [1], [0], [0], [0, 0, 1, 0], [], []>} : vector<8x8xf32>, vector<8x8xf32>, vector<8x8xf32> -> vector<8x8xf32>
    %c2 = arith.constant 2 : index
    %c0_52 = arith.constant 0 : index
    %c0_53 = arith.constant 0 : index
    %83 = vector.load %arg9[%c2, %c0_52, %c0_53] : memref<4x8x1xf32, #tpu.memory_space<vmem>>, vector<1x8x1xf32>
    %84 = vector.shape_cast %83 : vector<1x8x1xf32> to vector<8x1xf32>
    %c2_54 = arith.constant 2 : index
    %c0_55 = arith.constant 0 : index
    %c0_56 = arith.constant 0 : index
    %85 = vector.load %arg10[%c2_54, %c0_55, %c0_56] : memref<4x8x1xf32, #tpu.memory_space<vmem>>, vector<1x8x1xf32>
    %86 = vector.shape_cast %85 : vector<1x8x1xf32> to vector<8x1xf32>
    %cst_57 = arith.constant dense<0xFF800000> : vector<8xf32>
    %87 = vector.multi_reduction <maximumf>, %82, %cst_57 [1] : vector<8x8xf32> to vector<8xf32>
    %88 = vector.shape_cast %87 : vector<8xf32> to vector<8x1xf32>
    %89 = arith.maximumf %84, %88 : vector<8x1xf32>
    %90 = arith.subf %84, %89 : vector<8x1xf32>
    %91 = math.exp %90 : vector<8x1xf32>
    %92 = vector.broadcast %89 : vector<8x1xf32> to vector<8x8xf32>
    %93 = arith.subf %82, %92 : vector<8x8xf32>
    %94 = math.exp %93 : vector<8x8xf32>
    %95 = arith.mulf %91, %86 : vector<8x1xf32>
    %cst_58 = arith.constant dense<0.000000e+00> : vector<8xf32>
    %96 = vector.multi_reduction <add>, %94, %cst_58 [1] : vector<8x8xf32> to vector<8xf32>
    %97 = vector.shape_cast %96 : vector<8xf32> to vector<8x1xf32>
    %98 = arith.addf %95, %97 : vector<8x1xf32>
    %c2_59 = arith.constant 2 : index
    %c0_60 = arith.constant 0 : index
    %c0_61 = arith.constant 0 : index
    %99 = vector.load %arg10[%c2_59, %c0_60, %c0_61] : memref<4x8x1xf32, #tpu.memory_space<vmem>>, vector<1x8x1xf32>
    %100 = vector.shape_cast %99 : vector<1x8x1xf32> to vector<8x1xf32>
    %101 = vector.shape_cast %98 : vector<8x1xf32> to vector<1x8x1xf32>
    tpu.vector_store %arg10[%c2_59, %c0_60, %c0_61], %101 {strides = array<i32>} : memref<4x8x1xf32, #tpu.memory_space<vmem>>, vector<1x8x1xf32>,
    %c2_62 = arith.constant 2 : index
    %c0_63 = arith.constant 0 : index
    %c0_64 = arith.constant 0 : index
    %102 = vector.load %arg11[%c2_62, %c0_63, %c0_64] : memref<4x8x8xf32, #tpu.memory_space<vmem>>, vector<1x8x8xf32>
    %103 = vector.shape_cast %102 : vector<1x8x8xf32> to vector<8x8xf32>
    %104 = vector.broadcast %91 : vector<8x1xf32> to vector<8x8xf32>
    %105 = arith.mulf %104, %103 : vector<8x8xf32>
    %cst_65 = arith.constant dense<0.000000e+00> : vector<8x8xf32>
    %106 = tpu.matmul %94, %81, %cst_65 {dimension_numbers = #tpu.dot_dimension_numbers<[1], [0], [0], [1], [0, 0, 1, 1], [], []>} : vector<8x8xf32>, vector<8x8xf32>, vector<8x8xf32> -> vector<8x8xf32>
    %107 = arith.addf %105, %106 : vector<8x8xf32>
    %c2_66 = arith.constant 2 : index
    %c0_67 = arith.constant 0 : index
    %c0_68 = arith.constant 0 : index
    %108 = vector.load %arg11[%c2_66, %c0_67, %c0_68] : memref<4x8x8xf32, #tpu.memory_space<vmem>>, vector<1x8x8xf32>
    %109 = vector.shape_cast %108 : vector<1x8x8xf32> to vector<8x8xf32>
    %110 = vector.shape_cast %107 : vector<8x8xf32> to vector<1x8x8xf32>
    tpu.vector_store %arg11[%c2_66, %c0_67, %c0_68], %110 {strides = array<i32>} : memref<4x8x8xf32, #tpu.memory_space<vmem>>, vector<1x8x8xf32>,
    %c2_69 = arith.constant 2 : index
    %c0_70 = arith.constant 0 : index
    %c0_71 = arith.constant 0 : index
    %111 = vector.load %arg9[%c2_69, %c0_70, %c0_71] : memref<4x8x1xf32, #tpu.memory_space<vmem>>, vector<1x8x1xf32>
    %112 = vector.shape_cast %111 : vector<1x8x1xf32> to vector<8x1xf32>
    %113 = vector.shape_cast %89 : vector<8x1xf32> to vector<1x8x1xf32>
    tpu.vector_store %arg9[%c2_69, %c0_70, %c0_71], %113 {strides = array<i32>} : memref<4x8x1xf32, #tpu.memory_space<vmem>>, vector<1x8x1xf32>,
    %114 = vector.extract_strided_slice %4 {offsets = [0, 24], sizes = [8, 8], strides = [1, 1]} : vector<8x32xf32> to vector<8x8xf32>
    %115 = vector.extract_strided_slice %6 {offsets = [0, 24], sizes = [8, 8], strides = [1, 1]} : vector<8x32xf32> to vector<8x8xf32>
    %116 = vector.extract_strided_slice %8 {offsets = [0, 24], sizes = [8, 8], strides = [1, 1]} : vector<8x32xf32> to vector<8x8xf32>
    %cst_72 = arith.constant dense<0.000000e+00> : vector<8x8xf32>
    %117 = tpu.matmul %114, %115, %cst_72 {dimension_numbers = #tpu.dot_dimension_numbers<[1], [1], [0], [0], [0, 0, 1, 0], [], []>} : vector<8x8xf32>, vector<8x8xf32>, vector<8x8xf32> -> vector<8x8xf32>
    %c3 = arith.constant 3 : index
    %c0_73 = arith.constant 0 : index
    %c0_74 = arith.constant 0 : index
    %118 = vector.load %arg9[%c3, %c0_73, %c0_74] : memref<4x8x1xf32, #tpu.memory_space<vmem>>, vector<1x8x1xf32>
    %119 = vector.shape_cast %118 : vector<1x8x1xf32> to vector<8x1xf32>
    %c3_75 = arith.constant 3 : index
    %c0_76 = arith.constant 0 : index
    %c0_77 = arith.constant 0 : index
    %120 = vector.load %arg10[%c3_75, %c0_76, %c0_77] : memref<4x8x1xf32, #tpu.memory_space<vmem>>, vector<1x8x1xf32>
    %121 = vector.shape_cast %120 : vector<1x8x1xf32> to vector<8x1xf32>
    %cst_78 = arith.constant dense<0xFF800000> : vector<8xf32>
    %122 = vector.multi_reduction <maximumf>, %117, %cst_78 [1] : vector<8x8xf32> to vector<8xf32>
    %123 = vector.shape_cast %122 : vector<8xf32> to vector<8x1xf32>
    %124 = arith.maximumf %119, %123 : vector<8x1xf32>
    %125 = arith.subf %119, %124 : vector<8x1xf32>
    %126 = math.exp %125 : vector<8x1xf32>
    %127 = vector.broadcast %124 : vector<8x1xf32> to vector<8x8xf32>
    %128 = arith.subf %117, %127 : vector<8x8xf32>
    %129 = math.exp %128 : vector<8x8xf32>
    %130 = arith.mulf %126, %121 : vector<8x1xf32>
    %cst_79 = arith.constant dense<0.000000e+00> : vector<8xf32>
    %131 = vector.multi_reduction <add>, %129, %cst_79 [1] : vector<8x8xf32> to vector<8xf32>
    %132 = vector.shape_cast %131 : vector<8xf32> to vector<8x1xf32>
    %133 = arith.addf %130, %132 : vector<8x1xf32>
    %c3_80 = arith.constant 3 : index
    %c0_81 = arith.constant 0 : index
    %c0_82 = arith.constant 0 : index
    %134 = vector.load %arg10[%c3_80, %c0_81, %c0_82] : memref<4x8x1xf32, #tpu.memory_space<vmem>>, vector<1x8x1xf32>
    %135 = vector.shape_cast %134 : vector<1x8x1xf32> to vector<8x1xf32>
    %136 = vector.shape_cast %133 : vector<8x1xf32> to vector<1x8x1xf32>
    tpu.vector_store %arg10[%c3_80, %c0_81, %c0_82], %136 {strides = array<i32>} : memref<4x8x1xf32, #tpu.memory_space<vmem>>, vector<1x8x1xf32>,
    %c3_83 = arith.constant 3 : index
    %c0_84 = arith.constant 0 : index
    %c0_85 = arith.constant 0 : index
    %137 = vector.load %arg11[%c3_83, %c0_84, %c0_85] : memref<4x8x8xf32, #tpu.memory_space<vmem>>, vector<1x8x8xf32>
    %138 = vector.shape_cast %137 : vector<1x8x8xf32> to vector<8x8xf32>
    %139 = vector.broadcast %126 : vector<8x1xf32> to vector<8x8xf32>
    %140 = arith.mulf %139, %138 : vector<8x8xf32>
    %cst_86 = arith.constant dense<0.000000e+00> : vector<8x8xf32>
    %141 = tpu.matmul %129, %116, %cst_86 {dimension_numbers = #tpu.dot_dimension_numbers<[1], [0], [0], [1], [0, 0, 1, 1], [], []>} : vector<8x8xf32>, vector<8x8xf32>, vector<8x8xf32> -> vector<8x8xf32>
    %142 = arith.addf %140, %141 : vector<8x8xf32>
    %c3_87 = arith.constant 3 : index
    %c0_88 = arith.constant 0 : index
    %c0_89 = arith.constant 0 : index
    %143 = vector.load %arg11[%c3_87, %c0_88, %c0_89] : memref<4x8x8xf32, #tpu.memory_space<vmem>>, vector<1x8x8xf32>
    %144 = vector.shape_cast %143 : vector<1x8x8xf32> to vector<8x8xf32>
    %145 = vector.shape_cast %142 : vector<8x8xf32> to vector<1x8x8xf32>
    tpu.vector_store %arg11[%c3_87, %c0_88, %c0_89], %145 {strides = array<i32>} : memref<4x8x8xf32, #tpu.memory_space<vmem>>, vector<1x8x8xf32>,
    %c3_90 = arith.constant 3 : index
    %c0_91 = arith.constant 0 : index
    %c0_92 = arith.constant 0 : index
    %146 = vector.load %arg9[%c3_90, %c0_91, %c0_92] : memref<4x8x1xf32, #tpu.memory_space<vmem>>, vector<1x8x1xf32>
    %147 = vector.shape_cast %146 : vector<1x8x1xf32> to vector<8x1xf32>
    %148 = vector.shape_cast %124 : vector<8x1xf32> to vector<1x8x1xf32>
    tpu.vector_store %arg9[%c3_90, %c0_91, %c0_92], %148 {strides = array<i32>} : memref<4x8x1xf32, #tpu.memory_space<vmem>>, vector<1x8x1xf32>,
    %c0_i32_93 = arith.constant 0 : i32
    %149 = arith.cmpi eq, %arg2, %c0_i32_93 : i32
    %150 = arith.extui %149 : i1 to i32
    %c0_i32_94 = arith.constant 0 : i32
    %151 = arith.cmpi ne, %150, %c0_i32_94 : i32
    scf.if %151 {
      %c0_95 = arith.constant 0 : index
      %c0_96 = arith.constant 0 : index
      %c0_97 = arith.constant 0 : index
      %152 = vector.load %arg10[%c0_95, %c0_96, %c0_97] : memref<4x8x1xf32, #tpu.memory_space<vmem>>, vector<1x8x1xf32>
      %153 = vector.shape_cast %152 : vector<1x8x1xf32> to vector<8x1xf32>
      %154 = tpu.reciprocal %153 {approx = true} : vector<8x1xf32> -> vector<8x1xf32>
      %c0_98 = arith.constant 0 : index
      %c0_99 = arith.constant 0 : index
      %c0_100 = arith.constant 0 : index
      %155 = vector.load %arg11[%c0_98, %c0_99, %c0_100] : memref<4x8x8xf32, #tpu.memory_space<vmem>>, vector<1x8x8xf32>
      %156 = vector.shape_cast %155 : vector<1x8x8xf32> to vector<8x8xf32>
      %157 = vector.broadcast %154 : vector<8x1xf32> to vector<8x8xf32>
      %158 = arith.mulf %156, %157 : vector<8x8xf32>
      %c1_101 = arith.constant 1 : index
      %c0_102 = arith.constant 0 : index
      %c0_103 = arith.constant 0 : index
      %159 = vector.load %arg10[%c1_101, %c0_102, %c0_103] : memref<4x8x1xf32, #tpu.memory_space<vmem>>, vector<1x8x1xf32>
      %160 = vector.shape_cast %159 : vector<1x8x1xf32> to vector<8x1xf32>
      %161 = tpu.reciprocal %160 {approx = true} : vector<8x1xf32> -> vector<8x1xf32>
      %c1_104 = arith.constant 1 : index
      %c0_105 = arith.constant 0 : index
      %c0_106 = arith.constant 0 : index
      %162 = vector.load %arg11[%c1_104, %c0_105, %c0_106] : memref<4x8x8xf32, #tpu.memory_space<vmem>>, vector<1x8x8xf32>
      %163 = vector.shape_cast %162 : vector<1x8x8xf32> to vector<8x8xf32>
      %164 = vector.broadcast %161 : vector<8x1xf32> to vector<8x8xf32>
      %165 = arith.mulf %163, %164 : vector<8x8xf32>
      %c2_107 = arith.constant 2 : index
      %c0_108 = arith.constant 0 : index
      %c0_109 = arith.constant 0 : index
      %166 = vector.load %arg10[%c2_107, %c0_108, %c0_109] : memref<4x8x1xf32, #tpu.memory_space<vmem>>, vector<1x8x1xf32>
      %167 = vector.shape_cast %166 : vector<1x8x1xf32> to vector<8x1xf32>
      %168 = tpu.reciprocal %167 {approx = true} : vector<8x1xf32> -> vector<8x1xf32>
      %c2_110 = arith.constant 2 : index
      %c0_111 = arith.constant 0 : index
      %c0_112 = arith.constant 0 : index
      %169 = vector.load %arg11[%c2_110, %c0_111, %c0_112] : memref<4x8x8xf32, #tpu.memory_space<vmem>>, vector<1x8x8xf32>
      %170 = vector.shape_cast %169 : vector<1x8x8xf32> to vector<8x8xf32>
      %171 = vector.broadcast %168 : vector<8x1xf32> to vector<8x8xf32>
      %172 = arith.mulf %170, %171 : vector<8x8xf32>
      %c3_113 = arith.constant 3 : index
      %c0_114 = arith.constant 0 : index
      %c0_115 = arith.constant 0 : index
      %173 = vector.load %arg10[%c3_113, %c0_114, %c0_115] : memref<4x8x1xf32, #tpu.memory_space<vmem>>, vector<1x8x1xf32>
      %174 = vector.shape_cast %173 : vector<1x8x1xf32> to vector<8x1xf32>
      %175 = tpu.reciprocal %174 {approx = true} : vector<8x1xf32> -> vector<8x1xf32>
      %c3_116 = arith.constant 3 : index
      %c0_117 = arith.constant 0 : index
      %c0_118 = arith.constant 0 : index
      %176 = vector.load %arg11[%c3_116, %c0_117, %c0_118] : memref<4x8x8xf32, #tpu.memory_space<vmem>>, vector<1x8x8xf32>
      %177 = vector.shape_cast %176 : vector<1x8x8xf32> to vector<8x8xf32>
      %178 = vector.broadcast %175 : vector<8x1xf32> to vector<8x8xf32>
      %179 = arith.mulf %177, %178 : vector<8x8xf32>
      %180 = tpu.concatenate %158, %165, %172, %179 in 1 : vector<8x8xf32>, vector<8x8xf32>, vector<8x8xf32>, vector<8x8xf32> -> vector<8x32xf32>
      %c0_119 = arith.constant 0 : index
      %c0_120 = arith.constant 0 : index
      %181 = vector.load %arg6[%c0_119, %c0_120] : memref<32x32xf32, #tpu.memory_space<vmem>>, vector<32x32xf32>
      %cst_121 = arith.constant dense<0.000000e+00> : vector<8x32xf32>
      %182 = tpu.matmul %180, %181, %cst_121 {dimension_numbers = #tpu.dot_dimension_numbers<[1], [0], [0], [1], [0, 0, 1, 1], [], []>} : vector<8x32xf32>, vector<32x32xf32>, vector<8x32xf32> -> vector<8x32xf32>
      %c0_122 = arith.constant 0 : index
      %c0_123 = arith.constant 0 : index
      %183 = vector.load %arg7[%c0_122, %c0_123] : memref<1x32xf32, #tpu.memory_space<vmem>>, vector<1x32xf32>
      %184 = vector.broadcast %183 : vector<1x32xf32> to vector<8x32xf32>
      %185 = arith.addf %182, %184 : vector<8x32xf32>
      %c0_124 = arith.constant 0 : index
      %c0_125 = arith.constant 0 : index
      %c0_126 = arith.constant 0 : index
      %186 = vector.load %arg8[%c0_124, %c0_125, %c0_126] : memref<1x8x32xf32, #tpu.memory_space<vmem>>, vector<1x8x32xf32>
      %187 = vector.shape_cast %186 : vector<1x8x32xf32> to vector<8x32xf32>
      %188 = vector.shape_cast %185 : vector<8x32xf32> to vector<1x8x32xf32>
      tpu.vector_store %arg8[%c0_124, %c0_125, %c0_126], %188 {strides = array<i32>} : memref<1x8x32xf32, #tpu.memory_space<vmem>>, vector<1x8x32xf32>,
    } else {
    }
    return
  }
  func.func @transform_0(%arg0: i32, %arg1: i32, %arg2: i32) -> (i32, i32, i32) {
    %c0_i32 = arith.constant 0 : i32
    %c0_i32_0 = arith.constant 0 : i32
    return %arg0, %arg1, %c0_i32 : i32, i32, i32
  }
  func.func @transform_1(%arg0: i32, %arg1: i32, %arg2: i32) -> (i32, i32, i32) {
    %c0_i32 = arith.constant 0 : i32
    %c0_i32_0 = arith.constant 0 : i32
    return %arg0, %arg2, %c0_i32 : i32, i32, i32
  }
  func.func @transform_2(%arg0: i32, %arg1: i32, %arg2: i32) -> (i32, i32, i32) {
    %c0_i32 = arith.constant 0 : i32
    %c0_i32_0 = arith.constant 0 : i32
    return %arg0, %arg2, %c0_i32 : i32, i32, i32
  }
  func.func @transform_3(%arg0: i32, %arg1: i32, %arg2: i32) -> (i32, i32) {
    %c0_i32 = arith.constant 0 : i32
    %c0_i32_0 = arith.constant 0 : i32
    %c0_i32_1 = arith.constant 0 : i32
    return %c0_i32, %c0_i32_0 : i32, i32
  }
  func.func @transform_4(%arg0: i32, %arg1: i32, %arg2: i32) -> (i32, i32) {
    %c0_i32 = arith.constant 0 : i32
    %c0_i32_0 = arith.constant 0 : i32
    %c0_i32_1 = arith.constant 0 : i32
    return %c0_i32, %c0_i32_0 : i32, i32
  }
  func.func @transform_5(%arg0: i32, %arg1: i32, %arg2: i32) -> (i32, i32, i32) {
    %c0_i32 = arith.constant 0 : i32
    %c0_i32_0 = arith.constant 0 : i32
    return %arg0, %arg1, %c0_i32 : i32, i32, i32
  }
}

</mosaic_0001>

<llo_original>
// kernel: attention_layer_forward.2
$region0: #{attention_layer_forward.2}
  #allocation0 [shape = 'u32[]', space=smem, size = 0x4, offset = 0x4, fixed_abs, tag = 'smem constant byte address 0x4 - core index']
  #allocation1 [shape = 'u32[144,128]{1,0:T(1,128)}', space=vmem, size = 0x12000, scoped, tag = 'internal scratch']
  %s0 = inlined_call_operand.vmem [shape: f32[16,32], index: 0, kind: input, shape index: {}]
  %s1 = inlined_call_operand.vmem [shape: f32[32,32], index: 1, kind: input, shape index: {}]
  %s2 = inlined_call_operand.vmem [shape: f32[32,32], index: 2, kind: input, shape index: {}]
  %s3 = inlined_call_operand.vmem [shape: f32[32,32], index: 3, kind: input, shape index: {}]
  %s4 = inlined_call_operand.vmem [shape: f32[1,32], index: 4, kind: input, shape index: {}]
  %s5 = inlined_call_operand.vmem [shape: f32[1,32], index: 5, kind: input, shape index: {}]
  %s6 = inlined_call_operand.vmem [shape: f32[1,32], index: 6, kind: input, shape index: {}]
  %s7 = inlined_call_operand.vmem [shape: f32[16,32], index: 7, kind: output, shape index: {0}]
  %s8 = inlined_call_operand.vmem [shape: f32[16,32], index: 8, kind: output, shape index: {1}]
  %s9 = inlined_call_operand.vmem [shape: f32[16,32], index: 9, kind: output, shape index: {2}]
  %10 = xla_tuple %s7, %s8, %s9
  %s11 = sld [smem:[#allocation0]]
  $region54: #{attention_layer_forward.2} parent=0
    _
  %s13 = ssub.s32 1, %s11
  %s14 = scalar_select 0, %s13, %s11
  // Predicated region
  $region2: #{attention_layer_forward.2} parent=0 // pred_check
    _
  $region3: #{attention_layer_forward.2} parent=0 // pred_check_branch
    %16 = sbr.rel (0) target = $region5
  $region4: #{attention_layer_forward.2} parent=0 // pred_region
    _
  $region5: #{attention_layer_forward.2} parent=0 // pred_fallthru
    _
  // Predicated region
  $region6: #{attention_layer_forward.2} parent=0 // pred_check
    _
  $region7: #{attention_layer_forward.2} parent=0 // pred_check_branch
    %18 = sbr.rel (0) target = $region9
  $region8: #{attention_layer_forward.2} parent=0 // pred_region
    _
  $region9: #{attention_layer_forward.2} parent=0 // pred_fallthru
    _
  // Predicated region
  $region10: #{attention_layer_forward.2} parent=0 // pred_check
    _
  $region11: #{attention_layer_forward.2} parent=0 // pred_check_branch
    %20 = sbr.rel (0) target = $region13
  $region12: #{attention_layer_forward.2} parent=0 // pred_region
    _
  $region13: #{attention_layer_forward.2} parent=0 // pred_fallthru
    _
  // Predicated region
  $region14: #{attention_layer_forward.2} parent=0 // pred_check
    _
  $region15: #{attention_layer_forward.2} parent=0 // pred_check_branch
    %22 = sbr.rel (0) target = $region17
  $region16: #{attention_layer_forward.2} parent=0 // pred_region
    _
  $region17: #{attention_layer_forward.2} parent=0 // pred_fallthru
    _
  // Predicated region
  $region18: #{attention_layer_forward.2} parent=0 // pred_check
    _
  $region19: #{attention_layer_forward.2} parent=0 // pred_check_branch
    %24 = sbr.rel (0) target = $region21
  $region20: #{attention_layer_forward.2} parent=0 // pred_region
    _
  $region21: #{attention_layer_forward.2} parent=0 // pred_fallthru
    _
  // Predicated region
  $region22: #{attention_layer_forward.2} parent=0 // pred_check
    _
  $region23: #{attention_layer_forward.2} parent=0 // pred_check_branch
    %26 = sbr.rel (0) target = $region25
  $region24: #{attention_layer_forward.2} parent=0 // pred_region
    _
  $region25: #{attention_layer_forward.2} parent=0 // pred_fallthru
    _
  // Predicated region
  $region26: #{attention_layer_forward.2} parent=0 // pred_check
    _
  $region27: #{attention_layer_forward.2} parent=0 // pred_check_branch
    %28 = sbr.rel (0) target = $region29
  $region28: #{attention_layer_forward.2} parent=0 // pred_region
    _
  $region29: #{attention_layer_forward.2} parent=0 // pred_fallthru
    _
  %v29 = vld [vmem:[%s0] sm:$0xff]
  %v30 = vld [vmem:[%s0 + $0x8] sm:$0xff]
  %v31 = vld [vmem:[%s1] sm:$0xff]
  %v32 = vld [vmem:[%s1 + $0x8] sm:$0xff]
  %v33 = vld [vmem:[%s1 + $0x10] sm:$0xff]
  %v34 = vld [vmem:[%s1 + $0x18] sm:$0xff]
  %v35 = vld [vmem:[%s4] sm:$0x1]
  %v37 = vlaneseq
  %v38 = vshrl.u32 %v37, 7
  %v39 = vsub.s32 0, %v38
  %v40 = vrot.slane %v35, %v39
  %vm42 = vcmask 261120
  %v44 = vsel %vm42, %v29, 0
  %v47 = vsel %vm42, %v30, 0
  %49 = vmatprep.subr.mxu0 0.0
  %50 = vmatpush1.msra.mxu0 %v31
  %51 = vmatprep.subr.mxu0 0.0
  %52 = vmatpush1.msra.mxu0 %v32
  %53 = vmatprep.subr.mxu0 0.0
  %54 = vmatpush1.msra.mxu0 %v33
  %55 = vmatprep.subr.mxu0 0.0
  %56 = vmatpush1.msra.mxu0 %v34
  %57 = vmatprep.subr.mxu0 0.0
  %58 = vmatpush1.msra.mxu0 0.0
  %59 = vmatprep.subr.mxu0 0.0
  %60 = vmatpush1.msra.mxu0 0.0
  %61 = vmatprep.subr.mxu0 0.0
  %62 = vmatpush1.msra.mxu0 0.0
  %63 = vmatprep.subr.mxu0 0.0
  %64 = vmatpush1.msra.mxu0 0.0
  %65 = vmatprep.subr.mxu0 0.0
  %66 = vmatpush1.msra.mxu0 0.0
  %67 = vmatprep.subr.mxu0 0.0
  %68 = vmatpush1.msra.mxu0 0.0
  %69 = vmatprep.subr.mxu0 0.0
  %70 = vmatpush1.msra.mxu0 0.0
  %71 = vmatprep.subr.mxu0 0.0
  %72 = vmatpush1.msra.mxu0 0.0
  %73 = vmatprep.subr.mxu0 0.0
  %74 = vmatpush1.msra.mxu0 0.0
  %75 = vmatprep.subr.mxu0 0.0
  %76 = vmatpush1.msra.mxu0 0.0
  %77 = vmatprep.subr.mxu0 0.0
  %78 = vmatpush1.msra.mxu0 0.0
  %79 = vmatprep.subr.mxu0 0.0
  %80 = vmatpush1.msra.mxu0 0.0
  %81 = vmatprep.subr.mxu0 0.0
  %82 = vmatpush1.msra.mxu0 0.0
  %83 = vmatprep.subr.mxu0 0.0
  %84 = vmatpush1.msra.mxu0 0.0
  %85 = vmatprep.subr.mxu0 0.0
  %86 = vmatpush1.msra.mxu0 0.0
  %87 = vmatprep.subr.mxu0 0.0
  %88 = vmatpush1.msra.mxu0 0.0
  %89 = vmatprep.subr.mxu0 0.0
  %90 = vmatpush1.msra.mxu0 0.0
  %91 = vmatprep.subr.mxu0 0.0
  %92 = vmatpush1.msra.mxu0 0.0
  %93 = vmatprep.subr.mxu0 0.0
  %94 = vmatpush1.msra.mxu0 0.0
  %95 = vmatprep.subr.mxu0 0.0
  %96 = vmatpush1.msra.mxu0 0.0
  %97 = vmatprep.subr.mxu0 0.0
  %98 = vmatpush1.msra.mxu0 0.0
  %99 = vmatprep.subr.mxu0 0.0
  %100 = vmatpush1.msra.mxu0 0.0
  %101 = vmatprep.subr.mxu0 0.0
  %102 = vmatpush1.msra.mxu0 0.0
  %103 = vmatprep.subr.mxu0 0.0
  %104 = vmatpush1.msra.mxu0 0.0
  %105 = vmatprep.subr.mxu0 0.0
  %106 = vmatpush1.msra.mxu0 0.0
  %107 = vmatprep.subr.mxu0 0.0
  %108 = vmatpush1.msra.mxu0 0.0
  %109 = vmatprep.subr.mxu0 0.0
  %110 = vmatpush1.msra.mxu0 0.0
  %111 = vmatprep.subr.mxu0 0.0
  %112 = vmatpush1.msra.mxu0 0.0
  %113 = vmatprep.mubr.f32.mxu0 0.0
  %114 = vmatmul.mubr.f32.gmra.mrb[0].mxu0 %v44
  %v115 = vpop.f32.mrb[0].mxu0
  %v116 = vadd.f32 %v40, %v115
  %v117 = vpop.f32.mrb[0].mxu0
  %118 = vmatprep.mubr.f32.mxu0 0.0
  %119 = vmatmul.mubr.f32.gmra.mrb[0].mxu0 %v47
  %v120 = vpop.f32.mrb[0].mxu0
  %v121 = vadd.f32 %v40, %v120
  %v122 = vpop.f32.mrb[0].mxu0
  %123 = vdwg.mxu0
  %v124 = vmul.f32 %v116, 0.35355338
  %v125 = vmul.f32 %v121, 0.35355338
  %126 = vst.msk [vmem:[%s7] sm:$0xff] %vm42, %v124
  %127 = vst.msk [vmem:[%s7 + $0x8] sm:$0xff] %vm42, %v125
  %v128 = vld [vmem:[%s2] sm:$0xff]
  %v129 = vld [vmem:[%s2 + $0x8] sm:$0xff]
  %v130 = vld [vmem:[%s2 + $0x10] sm:$0xff]
  %v131 = vld [vmem:[%s2 + $0x18] sm:$0xff]
  %v132 = vld [vmem:[%s5] sm:$0x1]
  %v134 = vlaneseq
  %v135 = vshrl.u32 %v134, 7
  %v136 = vsub.s32 0, %v135
  %v137 = vrot.slane %v132, %v136
  %139 = vmatprep.subr.mxu0 0.0
  %140 = vmatpush1.msra.mxu0 %v128
  %141 = vmatprep.subr.mxu0 0.0
  %142 = vmatpush1.msra.mxu0 %v129
  %143 = vmatprep.subr.mxu0 0.0
  %144 = vmatpush1.msra.mxu0 %v130
  %145 = vmatprep.subr.mxu0 0.0
  %146 = vmatpush1.msra.mxu0 %v131
  %147 = vmatprep.subr.mxu0 0.0
  %148 = vmatpush1.msra.mxu0 0.0
  %149 = vmatprep.subr.mxu0 0.0
  %150 = vmatpush1.msra.mxu0 0.0
  %151 = vmatprep.subr.mxu0 0.0
  %152 = vmatpush1.msra.mxu0 0.0
  %153 = vmatprep.subr.mxu0 0.0
  %154 = vmatpush1.msra.mxu0 0.0
  %155 = vmatprep.subr.mxu0 0.0
  %156 = vmatpush1.msra.mxu0 0.0
  %157 = vmatprep.subr.mxu0 0.0
  %158 = vmatpush1.msra.mxu0 0.0
  %159 = vmatprep.subr.mxu0 0.0
  %160 = vmatpush1.msra.mxu0 0.0
  %161 = vmatprep.subr.mxu0 0.0
  %162 = vmatpush1.msra.mxu0 0.0
  %163 = vmatprep.subr.mxu0 0.0
  %164 = vmatpush1.msra.mxu0 0.0
  %165 = vmatprep.subr.mxu0 0.0
  %166 = vmatpush1.msra.mxu0 0.0
  %167 = vmatprep.subr.mxu0 0.0
  %168 = vmatpush1.msra.mxu0 0.0
  %169 = vmatprep.subr.mxu0 0.0
  %170 = vmatpush1.msra.mxu0 0.0
  %171 = vmatprep.subr.mxu0 0.0
  %172 = vmatpush1.msra.mxu0 0.0
  %173 = vmatprep.subr.mxu0 0.0
  %174 = vmatpush1.msra.mxu0 0.0
  %175 = vmatprep.subr.mxu0 0.0
  %176 = vmatpush1.msra.mxu0 0.0
  %177 = vmatprep.subr.mxu0 0.0
  %178 = vmatpush1.msra.mxu0 0.0
  %179 = vmatprep.subr.mxu0 0.0
  %180 = vmatpush1.msra.mxu0 0.0
  %181 = vmatprep.subr.mxu0 0.0
  %182 = vmatpush1.msra.mxu0 0.0
  %183 = vmatprep.subr.mxu0 0.0
  %184 = vmatpush1.msra.mxu0 0.0
  %185 = vmatprep.subr.mxu0 0.0
  %186 = vmatpush1.msra.mxu0 0.0
  %187 = vmatprep.subr.mxu0 0.0
  %188 = vmatpush1.msra.mxu0 0.0
  %189 = vmatprep.subr.mxu0 0.0
  %190 = vmatpush1.msra.mxu0 0.0
  %191 = vmatprep.subr.mxu0 0.0
  %192 = vmatpush1.msra.mxu0 0.0
  %193 = vmatprep.subr.mxu0 0.0
  %194 = vmatpush1.msra.mxu0 0.0
  %195 = vmatprep.subr.mxu0 0.0
  %196 = vmatpush1.msra.mxu0 0.0
  %197 = vmatprep.subr.mxu0 0.0
  %198 = vmatpush1.msra.mxu0 0.0
  %199 = vmatprep.subr.mxu0 0.0
  %200 = vmatpush1.msra.mxu0 0.0
  %201 = vmatprep.subr.mxu0 0.0
  %202 = vmatpush1.msra.mxu0 0.0
  %203 = vmatprep.mubr.f32.mxu0 0.0
  %204 = vmatmul.mubr.f32.gmra.mrb[0].mxu0 %v44
  %v205 = vpop.f32.mrb[0].mxu0
  %v206 = vadd.f32 %v137, %v205
  %v207 = vpop.f32.mrb[0].mxu0
  %208 = vmatprep.mubr.f32.mxu0 0.0
  %209 = vmatmul.mubr.f32.gmra.mrb[0].mxu0 %v47
  %v210 = vpop.f32.mrb[0].mxu0
  %v211 = vadd.f32 %v137, %v210
  %v212 = vpop.f32.mrb[0].mxu0
  %213 = vdwg.mxu0
  %214 = vst.msk [vmem:[%s8] sm:$0xff] %vm42, %v206
  %215 = vst.msk [vmem:[%s8 + $0x8] sm:$0xff] %vm42, %v211
  %v216 = vld [vmem:[%s3] sm:$0xff]
  %v217 = vld [vmem:[%s3 + $0x8] sm:$0xff]
  %v218 = vld [vmem:[%s3 + $0x10] sm:$0xff]
  %v219 = vld [vmem:[%s3 + $0x18] sm:$0xff]
  %v220 = vld [vmem:[%s6] sm:$0x1]
  %v222 = vlaneseq
  %v223 = vshrl.u32 %v222, 7
  %v224 = vsub.s32 0, %v223
  %v225 = vrot.slane %v220, %v224
  %227 = vmatprep.subr.mxu0 0.0
  %228 = vmatpush1.msra.mxu0 %v216
  %229 = vmatprep.subr.mxu0 0.0
  %230 = vmatpush1.msra.mxu0 %v217
  %231 = vmatprep.subr.mxu0 0.0
  %232 = vmatpush1.msra.mxu0 %v218
  %233 = vmatprep.subr.mxu0 0.0
  %234 = vmatpush1.msra.mxu0 %v219
  %235 = vmatprep.subr.mxu0 0.0
  %236 = vmatpush1.msra.mxu0 0.0
  %237 = vmatprep.subr.mxu0 0.0
  %238 = vmatpush1.msra.mxu0 0.0
  %239 = vmatprep.subr.mxu0 0.0
  %240 = vmatpush1.msra.mxu0 0.0
  %241 = vmatprep.subr.mxu0 0.0
  %242 = vmatpush1.msra.mxu0 0.0
  %243 = vmatprep.subr.mxu0 0.0
  %244 = vmatpush1.msra.mxu0 0.0
  %245 = vmatprep.subr.mxu0 0.0
  %246 = vmatpush1.msra.mxu0 0.0
  %247 = vmatprep.subr.mxu0 0.0
  %248 = vmatpush1.msra.mxu0 0.0
  %249 = vmatprep.subr.mxu0 0.0
  %250 = vmatpush1.msra.mxu0 0.0
  %251 = vmatprep.subr.mxu0 0.0
  %252 = vmatpush1.msra.mxu0 0.0
  %253 = vmatprep.subr.mxu0 0.0
  %254 = vmatpush1.msra.mxu0 0.0
  %255 = vmatprep.subr.mxu0 0.0
  %256 = vmatpush1.msra.mxu0 0.0
  %257 = vmatprep.subr.mxu0 0.0
  %258 = vmatpush1.msra.mxu0 0.0
  %259 = vmatprep.subr.mxu0 0.0
  %260 = vmatpush1.msra.mxu0 0.0
  %261 = vmatprep.subr.mxu0 0.0
  %262 = vmatpush1.msra.mxu0 0.0
  %263 = vmatprep.subr.mxu0 0.0
  %264 = vmatpush1.msra.mxu0 0.0
  %265 = vmatprep.subr.mxu0 0.0
  %266 = vmatpush1.msra.mxu0 0.0
  %267 = vmatprep.subr.mxu0 0.0
  %268 = vmatpush1.msra.mxu0 0.0
  %269 = vmatprep.subr.mxu0 0.0
  %270 = vmatpush1.msra.mxu0 0.0
  %271 = vmatprep.subr.mxu0 0.0
  %272 = vmatpush1.msra.mxu0 0.0
  %273 = vmatprep.subr.mxu0 0.0
  %274 = vmatpush1.msra.mxu0 0.0
  %275 = vmatprep.subr.mxu0 0.0
  %276 = vmatpush1.msra.mxu0 0.0
  %277 = vmatprep.subr.mxu0 0.0
  %278 = vmatpush1.msra.mxu0 0.0
  %279 = vmatprep.subr.mxu0 0.0
  %280 = vmatpush1.msra.mxu0 0.0
  %281 = vmatprep.subr.mxu0 0.0
  %282 = vmatpush1.msra.mxu0 0.0
  %283 = vmatprep.subr.mxu0 0.0
  %284 = vmatpush1.msra.mxu0 0.0
  %285 = vmatprep.subr.mxu0 0.0
  %286 = vmatpush1.msra.mxu0 0.0
  %287 = vmatprep.subr.mxu0 0.0
  %288 = vmatpush1.msra.mxu0 0.0
  %289 = vmatprep.subr.mxu0 0.0
  %290 = vmatpush1.msra.mxu0 0.0
  %291 = vmatprep.mubr.f32.mxu0 0.0
  %292 = vmatmul.mubr.f32.gmra.mrb[0].mxu0 %v44
  %v293 = vpop.f32.mrb[0].mxu0
  %v294 = vadd.f32 %v225, %v293
  %v295 = vpop.f32.mrb[0].mxu0
  %296 = vmatprep.mubr.f32.mxu0 0.0
  %297 = vmatmul.mubr.f32.gmra.mrb[0].mxu0 %v47
  %v298 = vpop.f32.mrb[0].mxu0
  %v299 = vadd.f32 %v225, %v298
  %v300 = vpop.f32.mrb[0].mxu0
  %301 = vdwg.mxu0
  %302 = vst.msk [vmem:[%s9] sm:$0xff] %vm42, %v294
  %303 = vst.msk [vmem:[%s9 + $0x8] sm:$0xff] %vm42, %v299
  // Predicated region
  $region30: #{attention_layer_forward.2} parent=0 // pred_check
    _
  $region31: #{attention_layer_forward.2} parent=0 // pred_check_branch
    %305 = sbr.rel (0) target = $region33
  $region32: #{attention_layer_forward.2} parent=0 // pred_region
    _
  $region33: #{attention_layer_forward.2} parent=0 // pred_fallthru
    _
  // Predicated region
  $region34: #{attention_layer_forward.2} parent=0 // pred_check
    _
  $region35: #{attention_layer_forward.2} parent=0 // pred_check_branch
    %307 = sbr.rel (0) target = $region37
  $region36: #{attention_layer_forward.2} parent=0 // pred_region
    _
  $region37: #{attention_layer_forward.2} parent=0 // pred_fallthru
    _
  // Predicated region
  $region38: #{attention_layer_forward.2} parent=0 // pred_check
    _
  $region39: #{attention_layer_forward.2} parent=0 // pred_check_branch
    %309 = sbr.rel (0) target = $region41
  $region40: #{attention_layer_forward.2} parent=0 // pred_region
    _
  $region41: #{attention_layer_forward.2} parent=0 // pred_fallthru
    _
  // Predicated region
  $region42: #{attention_layer_forward.2} parent=0 // pred_check
    _
  $region43: #{attention_layer_forward.2} parent=0 // pred_check_branch
    %311 = sbr.rel (0) target = $region45
  $region44: #{attention_layer_forward.2} parent=0 // pred_region
    _
  $region45: #{attention_layer_forward.2} parent=0 // pred_fallthru
    _
  // Predicated region
  $region46: #{attention_layer_forward.2} parent=0 // pred_check
    _
  $region47: #{attention_layer_forward.2} parent=0 // pred_check_branch
    %313 = sbr.rel (0) target = $region49
  $region48: #{attention_layer_forward.2} parent=0 // pred_region
    _
  $region49: #{attention_layer_forward.2} parent=0 // pred_fallthru
    _
  // Predicated region
  $region50: #{attention_layer_forward.2} parent=0 // pred_check
    _
  $region51: #{attention_layer_forward.2} parent=0 // pred_check_branch
    %315 = sbr.rel (0) target = $region53
  $region52: #{attention_layer_forward.2} parent=0 // pred_region
    _
  $region53: #{attention_layer_forward.2} parent=0 // pred_fallthru
    _

// kernel: attention_layer_forward.3
$region0: #{attention_layer_forward.3}
  #allocation0 [shape = 'u32[]', space=smem, size = 0x4, offset = 0x4, fixed_abs, tag = 'smem constant byte address 0x4 - core index']
  #allocation1 [shape = 'u32[144,128]{1,0:T(1,128)}', space=vmem, size = 0x12000, scoped, tag = 'internal scratch']
  #allocation2 [shape = 'f32[4,8,1]{2,1,0:T(8,128)}', space=vmem, size = 0x4000, scoped, tag = 'scratch operand']
  #allocation3 [shape = 'f32[4,8,1]{2,1,0:T(8,128)}', space=vmem, size = 0x4000, scoped, tag = 'scratch operand']
  #allocation4 [shape = 'f32[4,8,8]{2,1,0:T(8,128)}', space=vmem, size = 0x4000, scoped, tag = 'scratch operand']
  %s0 = inlined_call_operand.vmem [shape: f32[2,8,32], index: 0, kind: input, shape index: {}]
  %s1 = inlined_call_operand.vmem [shape: f32[2,8,32], index: 1, kind: input, shape index: {}]
  %s2 = inlined_call_operand.vmem [shape: f32[2,8,32], index: 2, kind: input, shape index: {}]
  %s3 = inlined_call_operand.vmem [shape: f32[32,32], index: 3, kind: input, shape index: {}]
  %s4 = inlined_call_operand.vmem [shape: f32[1,32], index: 4, kind: input, shape index: {}]
  %s5 = inlined_call_operand.vmem [shape: f32[2,8,32], index: 5, kind: output, shape index: {}]
  %s6 = sld [smem:[#allocation0]]
  $region61: #{attention_layer_forward.3} parent=0
    _
  %s8 = ssub.s32 1, %s6
  %s9 = scalar_select 0, %s8, %s6
  loop: start=0, step=1, limit=4
  $region2: #{attention_layer_forward.3} parent=0 // loop_pre_header
    _
  $region3: #{attention_layer_forward.3} parent=0 // loop_header
    %s11 = sphi 0, %s15
    %p12 = scmp.ge.s32.totalorder %s11, 4
    %s18 = sphi 0, %s37
    %s19 = sphi 0, %s33
    %s20 = sphi 0, %s29
    %s21 = sphi 0, %s18
    %s22 = sphi 0, %s19
    %s23 = sphi 0, %s20
    %s24 = sphi 0, %s21
    %s25 = sphi 0, %s22
    %s26 = sphi 0, %s23
    %s42 = sphi 0, %s44
    %s45 = sphi 0, %s42
    %s46 = sphi 0, %s45
    %s62 = sphi 0, %s46
    %s70 = sphi 0, %s72
    %s73 = sphi 0, %s70
    %s74 = sphi 0, %s73
    %s90 = sphi 0, %s74
    %s98 = sphi 0, %s100
    %s101 = sphi 0, %s98
    %s102 = sphi 0, %s101
    %s118 = sphi 0, %s102
    %s122 = sphi 0, %s122
    %s124 = sphi 0, %s122
    %s125 = sphi 0, %s124
    %s139 = sphi 0, %s125
    %s143 = sphi 0, %s143
    %s145 = sphi 0, %s143
    %s146 = sphi 0, %s145
    %s160 = sphi 0, %s146
    %s168 = sphi 0, %s170
    %s171 = sphi 0, %s168
    %s172 = sphi 0, %s171
    %s188 = sphi 0, %s172
  $region4: #{attention_layer_forward.3} parent=0 // loop_header_branch
    %14 = sbr.rel (%p12) target = $region8
  $region5: #{attention_layer_forward.3} parent=0 // loop_body
    %s16 = ssub.s32 %s11, 1
    %s17 = ssub.s32 %s11, 2
    %s27 = sadd.s32 1, %s20
    %p28 = scmp.ge.s32.totalorder %s27, 1
    %s29 = scalar_select %p28, 0, %s27
    %s30 = sadd.s32 1, %s19
    %s31 = scalar_select %p28, %s30, %s19
    %p32 = scmp.ge.s32.totalorder %s31, 1
    %s33 = scalar_select %p32, 0, %s31
    %s34 = sadd.s32 1, %s18
    %s35 = scalar_select %p32, %s34, %s18
    %p36 = scmp.ge.s32.totalorder %s35, 2
    %s37 = scalar_select %p36, 0, %s35
    %s38 = ssub.s32 %s18, %s37
    %s39 = ssub.s32 %s19, %s33
    %s40 = sor.u32 %s38, %s39
    %p41 = scmp.eq.s32.totalorder %s40, 0
    %s43 = sadd.s32 %s42, 1
    %s44 = scalar_select %p41, %s42, %s43
    %p47 = pneg %p41
    %p48 = scmp.eq.s32.totalorder %s11, 1
    %p49 = por %p47, %p48
    %p50 = scmp.ne.s32.totalorder %s42, %s45
    %p51 = scmp.eq.s32.totalorder %s11, 0
    %p52 = por %p50, %p51
    %p53 = scmp.ne.s32.totalorder %s42, %s45
    %p54 = scmp.eq.s32.totalorder %s16, 1
    %p55 = por %p53, %p54
    %p56 = scmp.ne.s32.totalorder %s45, %s46
    %p57 = scmp.eq.s32.totalorder %s16, 0
    %p58 = por %p56, %p57
    %p59 = scmp.ne.s32.totalorder %s45, %s46
    %p60 = scmp.eq.s32.totalorder %s17, 1
    %p61 = por %p59, %p60
    %p63 = scmp.ne.s32.totalorder %s46, %s62
    %p64 = scmp.eq.s32.totalorder %s17, 0
    %p65 = por %p63, %p64
    %s66 = ssub.s32 %s18, %s37
    %s67 = ssub.s32 %s20, %s29
    %s68 = sor.u32 %s66, %s67
    %p69 = scmp.eq.s32.totalorder %s68, 0
    %s71 = sadd.s32 %s70, 1
    %s72 = scalar_select %p69, %s70, %s71
    %p75 = pneg %p69
    %p76 = scmp.eq.s32.totalorder %s11, 1
    %p77 = por %p75, %p76
    %p78 = scmp.ne.s32.totalorder %s70, %s73
    %p79 = scmp.eq.s32.totalorder %s11, 0
    %p80 = por %p78, %p79
    %p81 = scmp.ne.s32.totalorder %s70, %s73
    %p82 = scmp.eq.s32.totalorder %s16, 1
    %p83 = por %p81, %p82
    %p84 = scmp.ne.s32.totalorder %s73, %s74
    %p85 = scmp.eq.s32.totalorder %s16, 0
    %p86 = por %p84, %p85
    %p87 = scmp.ne.s32.totalorder %s73, %s74
    %p88 = scmp.eq.s32.totalorder %s17, 1
    %p89 = por %p87, %p88
    %p91 = scmp.ne.s32.totalorder %s74, %s90
    %p92 = scmp.eq.s32.totalorder %s17, 0
    %p93 = por %p91, %p92
    %s94 = ssub.s32 %s18, %s37
    %s95 = ssub.s32 %s20, %s29
    %s96 = sor.u32 %s94, %s95
    %p97 = scmp.eq.s32.totalorder %s96, 0
    %s99 = sadd.s32 %s98, 1
    %s100 = scalar_select %p97, %s98, %s99
    %p103 = pneg %p97
    %p104 = scmp.eq.s32.totalorder %s11, 1
    %p105 = por %p103, %p104
    %p106 = scmp.ne.s32.totalorder %s98, %s101
    %p107 = scmp.eq.s32.totalorder %s11, 0
    %p108 = por %p106, %p107
    %p109 = scmp.ne.s32.totalorder %s98, %s101
    %p110 = scmp.eq.s32.totalorder %s16, 1
    %p111 = por %p109, %p110
    %p112 = scmp.ne.s32.totalorder %s101, %s102
    %p113 = scmp.eq.s32.totalorder %s16, 0
    %p114 = por %p112, %p113
    %p115 = scmp.ne.s32.totalorder %s101, %s102
    %p116 = scmp.eq.s32.totalorder %s17, 1
    %p117 = por %p115, %p116
    %p119 = scmp.ne.s32.totalorder %s102, %s118
    %p120 = scmp.eq.s32.totalorder %s17, 0
    %p121 = por %p119, %p120
    %s123 = sadd.s32 %s122, 1
    %p126 = scmp.eq.s32.totalorder %s11, 1
    %p127 = scmp.ne.s32.totalorder %s122, %s124
    %p128 = scmp.eq.s32.totalorder %s11, 0
    %p129 = por %p127, %p128
    %p130 = scmp.ne.s32.totalorder %s122, %s124
    %p131 = scmp.eq.s32.totalorder %s16, 1
    %p132 = por %p130, %p131
    %p133 = scmp.ne.s32.totalorder %s124, %s125
    %p134 = scmp.eq.s32.totalorder %s16, 0
    %p135 = por %p133, %p134
    %p136 = scmp.ne.s32.totalorder %s124, %s125
    %p137 = scmp.eq.s32.totalorder %s17, 1
    %p138 = por %p136, %p137
    %p140 = scmp.ne.s32.totalorder %s125, %s139
    %p141 = scmp.eq.s32.totalorder %s17, 0
    %p142 = por %p140, %p141
    %s144 = sadd.s32 %s143, 1
    %p147 = scmp.eq.s32.totalorder %s11, 1
    %p148 = scmp.ne.s32.totalorder %s143, %s145
    %p149 = scmp.eq.s32.totalorder %s11, 0
    %p150 = por %p148, %p149
    %p151 = scmp.ne.s32.totalorder %s143, %s145
    %p152 = scmp.eq.s32.totalorder %s16, 1
    %p153 = por %p151, %p152
    %p154 = scmp.ne.s32.totalorder %s145, %s146
    %p155 = scmp.eq.s32.totalorder %s16, 0
    %p156 = por %p154, %p155
    %p157 = scmp.ne.s32.totalorder %s145, %s146
    %p158 = scmp.eq.s32.totalorder %s17, 1
    %p159 = por %p157, %p158
    %p161 = scmp.ne.s32.totalorder %s146, %s160
    %p162 = scmp.eq.s32.totalorder %s17, 0
    %p163 = por %p161, %p162
    %s164 = ssub.s32 %s18, %s37
    %s165 = ssub.s32 %s19, %s33
    %s166 = sor.u32 %s164, %s165
    %p167 = scmp.eq.s32.totalorder %s166, 0
    %s169 = sadd.s32 %s168, 1
    %s170 = scalar_select %p167, %s168, %s169
    %p173 = pneg %p167
    %p174 = scmp.eq.s32.totalorder %s11, 1
    %p175 = por %p173, %p174
    %p176 = scmp.ne.s32.totalorder %s168, %s171
    %p177 = scmp.eq.s32.totalorder %s11, 0
    %p178 = por %p176, %p177
    %p179 = scmp.ne.s32.totalorder %s168, %s171
    %p180 = scmp.eq.s32.totalorder %s16, 1
    %p181 = por %p179, %p180
    %p182 = scmp.ne.s32.totalorder %s171, %s172
    %p183 = scmp.eq.s32.totalorder %s16, 0
    %p184 = por %p182, %p183
    %p185 = scmp.ne.s32.totalorder %s171, %s172
    %p186 = scmp.eq.s32.totalorder %s17, 1
    %p187 = por %p185, %p186
    %p189 = scmp.ne.s32.totalorder %s172, %s188
    %p190 = scmp.eq.s32.totalorder %s17, 0
    %p191 = por %p189, %p190
    %p192 = scmp.le.s32.totalorder 1, %s11
    %p193 = scmp.lt.s32.totalorder %s11, 3
    %p194 = pnand %p192, %p193
    %p195 = pneg %p194
    // Predicated region
    $region9: #{attention_layer_forward.3} parent=5 // pred_check
      _
    $region10: #{attention_layer_forward.3} parent=5 // pred_check_branch
      %197 = sbr.rel (%p194) target = $region12
    $region11: #{attention_layer_forward.3} parent=5 // pred_region
      %s198 = ssub.s32 %s11, 1
      // Predicated region
      $region13: #{attention_layer_forward.3} parent=11 // pred_check
        %p199 = pneg %p135
      $region14: #{attention_layer_forward.3} parent=11 // pred_check_branch
        %201 = sbr.rel (%p199) target = $region16
      $region15: #{attention_layer_forward.3} parent=11 // pred_region
        _
      $region16: #{attention_layer_forward.3} parent=11 // pred_fallthru
        _
      // Predicated region
      $region17: #{attention_layer_forward.3} parent=11 // pred_check
        %p202 = pneg %p156
      $region18: #{attention_layer_forward.3} parent=11 // pred_check_branch
        %204 = sbr.rel (%p202) target = $region20
      $region19: #{attention_layer_forward.3} parent=11 // pred_region
        _
      $region20: #{attention_layer_forward.3} parent=11 // pred_fallthru
        _
    $region12: #{attention_layer_forward.3} parent=5 // pred_fallthru
      _
    %p205 = scmp.lt.s32.totalorder %s11, 2
    // Predicated region
    $region21: #{attention_layer_forward.3} parent=5 // pred_check
      %p206 = pneg %p205
    $region22: #{attention_layer_forward.3} parent=5 // pred_check_branch
      %208 = sbr.rel (%p206) target = $region24
    $region23: #{attention_layer_forward.3} parent=5 // pred_region
      // Predicated region
      $region25: #{attention_layer_forward.3} parent=23 // pred_check
        %p209 = pneg %p52
      $region26: #{attention_layer_forward.3} parent=23 // pred_check_branch
        %211 = sbr.rel (%p209) target = $region28
      $region27: #{attention_layer_forward.3} parent=23 // pred_region
        %p212 = scmp.lt.s32.totalorder %s18, 1
        %s213 = scalar_select %p212, %s18, 1
        %p214 = scmp.lt.s32.totalorder %s19, 0
        %s215 = scalar_select %p214, %s19, 0
        %s216 = sadd.s32 %s215, %s213
        %s217 = smul.addr %s216, 8
        %s218 = scalar_lea.vmem %s0, %s217
      $region28: #{attention_layer_forward.3} parent=23 // pred_fallthru
        _
      // Predicated region
      $region29: #{attention_layer_forward.3} parent=23 // pred_check
        %p219 = pneg %p80
      $region30: #{attention_layer_forward.3} parent=23 // pred_check_branch
        %221 = sbr.rel (%p219) target = $region32
      $region31: #{attention_layer_forward.3} parent=23 // pred_region
        %p222 = scmp.lt.s32.totalorder %s18, 1
        %s223 = scalar_select %p222, %s18, 1
        %p224 = scmp.lt.s32.totalorder %s20, 0
        %s225 = scalar_select %p224, %s20, 0
        %s226 = sadd.s32 %s225, %s223
        %s227 = smul.addr %s226, 8
        %s228 = scalar_lea.vmem %s1, %s227
      $region32: #{attention_layer_forward.3} parent=23 // pred_fallthru
        _
      // Predicated region
      $region33: #{attention_layer_forward.3} parent=23 // pred_check
        %p229 = pneg %p108
      $region34: #{attention_layer_forward.3} parent=23 // pred_check_branch
        %231 = sbr.rel (%p229) target = $region36
      $region35: #{attention_layer_forward.3} parent=23 // pred_region
        %p232 = scmp.lt.s32.totalorder %s18, 1
        %s233 = scalar_select %p232, %s18, 1
        %p234 = scmp.lt.s32.totalorder %s20, 0
        %s235 = scalar_select %p234, %s20, 0
        %s236 = sadd.s32 %s235, %s233
        %s237 = smul.addr %s236, 8
        %s238 = scalar_lea.vmem %s2, %s237
      $region36: #{attention_layer_forward.3} parent=23 // pred_fallthru
        _
    $region24: #{attention_layer_forward.3} parent=5 // pred_fallthru
      _
    %p239 = scmp.le.s32.totalorder 1, %s11
    %p240 = scmp.lt.s32.totalorder %s11, 3
    %p241 = pnand %p239, %p240
    %p242 = pneg %p241
    // Predicated region
    $region37: #{attention_layer_forward.3} parent=5 // pred_check
      _
    $region38: #{attention_layer_forward.3} parent=5 // pred_check_branch
      %244 = sbr.rel (%p241) target = $region40
    $region39: #{attention_layer_forward.3} parent=5 // pred_region
      %s245 = ssub.s32 %s11, 1
      %p246 = scmp.lt.s32.totalorder %s21, 1
      %s247 = scalar_select %p246, %s21, 1
      %p248 = scmp.lt.s32.totalorder %s22, 0
      %s249 = scalar_select %p248, %s22, 0
      %s250 = sadd.s32 %s249, %s247
      %s251 = smul.addr %s250, 8
      %s252 = scalar_lea.vmem %s0, %s251
      %p253 = pneg %p58
      %p254 = pneg %p55
      %p255 = scmp.lt.s32.totalorder %s21, 1
      %s256 = scalar_select %p255, %s21, 1
      %p257 = scmp.lt.s32.totalorder %s23, 0
      %s258 = scalar_select %p257, %s23, 0
      %s259 = sadd.s32 %s258, %s256
      %s260 = smul.addr %s259, 8
      %s261 = scalar_lea.vmem %s1, %s260
      %p262 = pneg %p86
      %p263 = pneg %p83
      %p264 = scmp.lt.s32.totalorder %s21, 1
      %s265 = scalar_select %p264, %s21, 1
      %p266 = scmp.lt.s32.totalorder %s23, 0
      %s267 = scalar_select %p266, %s23, 0
      %s268 = sadd.s32 %s267, %s265
      %s269 = smul.addr %s268, 8
      %s270 = scalar_lea.vmem %s2, %s269
      %p271 = pneg %p114
      %p272 = pneg %p111
      %p273 = pneg %p135
      %p274 = pneg %p132
      %p275 = pneg %p156
      %p276 = pneg %p153
      %p277 = pneg %p184
      %p278 = pneg %p181
      %p279 = scmp.lt.s32.totalorder %s21, 1
      %s280 = scalar_select %p279, %s21, 1
      %p281 = scmp.lt.s32.totalorder %s22, 0
      %s282 = scalar_select %p281, %s22, 0
      %s283 = sadd.s32 %s282, %s280
      %s284 = smul.addr %s283, 8
      %s285 = scalar_lea.vmem %s5, %s284
      %p286 = scmp.lt.s32.totalorder %s21, 1
      %s287 = scalar_select %p286, %s21, 1
      %p288 = scmp.lt.s32.totalorder %s22, 0
      %s289 = scalar_select %p288, %s22, 0
      %s290 = sadd.s32 %s289, %s287
      %s291 = smul.addr %s290, 8
      %s292 = scalar_lea.vmem %s0, %s291
      %p293 = scmp.lt.s32.totalorder %s21, 1
      %s294 = scalar_select %p293, %s21, 1
      %p295 = scmp.lt.s32.totalorder %s23, 0
      %s296 = scalar_select %p295, %s23, 0
      %s297 = sadd.s32 %s296, %s294
      %s298 = smul.addr %s297, 8
      %s299 = scalar_lea.vmem %s1, %s298
      %p300 = scmp.lt.s32.totalorder %s21, 1
      %s301 = scalar_select %p300, %s21, 1
      %p302 = scmp.lt.s32.totalorder %s23, 0
      %s303 = scalar_select %p302, %s23, 0
      %s304 = sadd.s32 %s303, %s301
      %s305 = smul.addr %s304, 8
      %s306 = scalar_lea.vmem %s2, %s305
      %p307 = scmp.lt.s32.totalorder %s21, 1
      %s308 = scalar_select %p307, %s21, 1
      %p309 = scmp.lt.s32.totalorder %s22, 0
      %s310 = scalar_select %p309, %s22, 0
      %s311 = sadd.s32 %s310, %s308
      %s312 = smul.addr %s311, 8
      %s313 = scalar_lea.vmem %s5, %s312
      %p314 = scmp.eq.s32.totalorder %s23, 0
      // Predicated region
      $region41: #{attention_layer_forward.3} parent=39 // pred_check
        %p315 = pneg %p314
      $region42: #{attention_layer_forward.3} parent=39 // pred_check_branch
        %317 = sbr.rel (%p315) target = $region44
      $region43: #{attention_layer_forward.3} parent=39 // pred_region
        %vm318 = vcmask 7168
        %319 = vst.msk [vmem:[#allocation2] sm:$0xff] %vm318, -inf
        %320 = vst.msk [vmem:[#allocation2 + $0x8] sm:$0xff] %vm318, -inf
        %321 = vst.msk [vmem:[#allocation2 + $0x10] sm:$0xff] %vm318, -inf
        %322 = vst.msk [vmem:[#allocation2 + $0x18] sm:$0xff] %vm318, -inf
        %323 = vst.msk [vmem:[#allocation3] sm:$0xff] %vm318, 0.0
        %324 = vst.msk [vmem:[#allocation3 + $0x8] sm:$0xff] %vm318, 0.0
        %325 = vst.msk [vmem:[#allocation3 + $0x10] sm:$0xff] %vm318, 0.0
        %326 = vst.msk [vmem:[#allocation3 + $0x18] sm:$0xff] %vm318, 0.0
        %vm327 = vcmask 64512
        %328 = vst.msk [vmem:[#allocation4] sm:$0xff] %vm327, 0.0
        %329 = vst.msk [vmem:[#allocation4 + $0x8] sm:$0xff] %vm327, 0.0
        %330 = vst.msk [vmem:[#allocation4 + $0x10] sm:$0xff] %vm327, 0.0
        %331 = vst.msk [vmem:[#allocation4 + $0x18] sm:$0xff] %vm327, 0.0
      $region44: #{attention_layer_forward.3} parent=39 // pred_fallthru
        _
      %v332 = vld [vmem:[%s292] sm:$0xff]
      %v333 = vld [vmem:[%s299] sm:$0xff]
      %v334 = vld [vmem:[%s306] sm:$0xff]
      %vm335 = vcmask 64512
      %v337 = vsel %vm335, %v332, 0
      %v340 = vsel %vm335, %v333, 0
      %342 = vmatprep.subr.mxu0 0.0
      %343 = vmatpush1.xpose.msra.mxu0 %v340
      %344 = vmatprep.subr.mxu0 0.0
      %345 = vmatpush1.xpose.msra.mxu0 0.0
      %346 = vmatprep.subr.mxu0 0.0
      %347 = vmatpush1.xpose.msra.mxu0 0.0
      %348 = vmatprep.subr.mxu0 0.0
      %349 = vmatpush1.xpose.msra.mxu0 0.0
      %350 = vmatprep.subr.mxu0 0.0
      %351 = vmatpush1.xpose.msra.mxu0 0.0
      %352 = vmatprep.subr.mxu0 0.0
      %353 = vmatpush1.xpose.msra.mxu0 0.0
      %354 = vmatprep.subr.mxu0 0.0
      %355 = vmatpush1.xpose.msra.mxu0 0.0
      %356 = vmatprep.subr.mxu0 0.0
      %357 = vmatpush1.xpose.msra.mxu0 0.0
      %358 = vmatprep.subr.mxu0 0.0
      %359 = vmatpush1.xpose.msra.mxu0 0.0
      %360 = vmatprep.subr.mxu0 0.0
      %361 = vmatpush1.xpose.msra.mxu0 0.0
      %362 = vmatprep.subr.mxu0 0.0
      %363 = vmatpush1.xpose.msra.mxu0 0.0
      %364 = vmatprep.subr.mxu0 0.0
      %365 = vmatpush1.xpose.msra.mxu0 0.0
      %366 = vmatprep.subr.mxu0 0.0
      %367 = vmatpush1.xpose.msra.mxu0 0.0
      %368 = vmatprep.subr.mxu0 0.0
      %369 = vmatpush1.xpose.msra.mxu0 0.0
      %370 = vmatprep.subr.mxu0 0.0
      %371 = vmatpush1.xpose.msra.mxu0 0.0
      %372 = vmatprep.subr.mxu0 0.0
      %373 = vmatpush1.xpose.msra.mxu0 0.0
      %374 = vmatprep.subr.mxu0 0.0
      %375 = vmatpush1.xpose.msra.mxu0 0.0
      %376 = vmatprep.subr.mxu0 0.0
      %377 = vmatpush1.xpose.msra.mxu0 0.0
      %378 = vmatprep.subr.mxu0 0.0
      %379 = vmatpush1.xpose.msra.mxu0 0.0
      %380 = vmatprep.subr.mxu0 0.0
      %381 = vmatpush1.xpose.msra.mxu0 0.0
      %382 = vmatprep.subr.mxu0 0.0
      %383 = vmatpush1.xpose.msra.mxu0 0.0
      %384 = vmatprep.subr.mxu0 0.0
      %385 = vmatpush1.xpose.msra.mxu0 0.0
      %386 = vmatprep.subr.mxu0 0.0
      %387 = vmatpush1.xpose.msra.mxu0 0.0
      %388 = vmatprep.subr.mxu0 0.0
      %389 = vmatpush1.xpose.msra.mxu0 0.0
      %390 = vmatprep.subr.mxu0 0.0
      %391 = vmatpush1.xpose.msra.mxu0 0.0
      %392 = vmatprep.subr.mxu0 0.0
      %393 = vmatpush1.xpose.msra.mxu0 0.0
      %394 = vmatprep.subr.mxu0 0.0
      %395 = vmatpush1.xpose.msra.mxu0 0.0
      %396 = vmatprep.subr.mxu0 0.0
      %397 = vmatpush1.xpose.msra.mxu0 0.0
      %398 = vmatprep.subr.mxu0 0.0
      %399 = vmatpush1.xpose.msra.mxu0 0.0
      %400 = vmatprep.subr.mxu0 0.0
      %401 = vmatpush1.xpose.msra.mxu0 0.0
      %402 = vmatprep.subr.mxu0 0.0
      %403 = vmatpush1.xpose.msra.mxu0 0.0
      %404 = vmatprep.subr.mxu0 0.0
      %405 = vmatpush1.xpose.msra.mxu0 0.0
      %406 = vmatprep.mubr.f32.mxu0 0.0
      %407 = vmatmul.mubr.f32.gmra.mrb[0].mxu0 %v337
      %v408 = vpop.f32.mrb[0].mxu0
      %v409 = vadd.f32 0.0, %v408
      %v410 = vpop.f32.mrb[0].mxu0
      %411 = vdwg.mxu0
      %v412 = vld [vmem:[#allocation2] sm:$0xff]
      %v413 = vld [vmem:[#allocation3] sm:$0xff]
      %v414 = vsel %vm335, %v409, -inf
      %415 = vmax.xlane.f32.xlu0 %v414
      %v416 = vpop.xlane.xlu0 %415
      %v417 = vmax.f32 %v412, %v416
      %v418 = vsub.f32 %v412, %v417
      %v419 = vmul.f32 %v418, 1.442695
      %v420 = vpow.pop %v419
      %422 = vset.pattern.permute.xlu0 0
      %423 = vperm.xlu0 %422, %v417
      %v424 = vpop.permute.xlu0 %423
      %v426 = vsub.f32 %v409, %v424
      %v427 = vmul.f32 %v426, 1.442695
      %v428 = vpow.pop %v427
      %v429 = vmul.f32 %v420, %v413
      %v430 = vsel %vm335, %v428, 0.0
      %431 = vadd.xlane.f32.xlu0 %v430
      %v432 = vpop.xlane.xlu0 %431
      %v433 = vadd.f32 %v429, %v432
      %vm434 = vcmask 7168
      %435 = vst.msk [vmem:[#allocation3] sm:$0xff] %vm434, %v433
      %v436 = vld [vmem:[#allocation4] sm:$0xff]
      %438 = vset.pattern.permute.xlu0 0
      %439 = vperm.xlu0 %438, %v420
      %v440 = vpop.permute.xlu0 %439
      %v442 = vmul.f32 %v440, %v436
      %v444 = vsel %vm335, %v428, 0
      %446 = vmatprep.subr.mxu0 0.0
      %447 = vmatpush1.msra.mxu0 %v334
      %448 = vmatprep.subr.mxu0 0.0
      %449 = vmatpush1.msra.mxu0 0.0
      %450 = vmatprep.subr.mxu0 0.0
      %451 = vmatpush1.msra.mxu0 0.0
      %452 = vmatprep.subr.mxu0 0.0
      %453 = vmatpush1.msra.mxu0 0.0
      %454 = vmatprep.subr.mxu0 0.0
      %455 = vmatpush1.msra.mxu0 0.0
      %456 = vmatprep.subr.mxu0 0.0
      %457 = vmatpush1.msra.mxu0 0.0
      %458 = vmatprep.subr.mxu0 0.0
      %459 = vmatpush1.msra.mxu0 0.0
      %460 = vmatprep.subr.mxu0 0.0
      %461 = vmatpush1.msra.mxu0 0.0
      %462 = vmatprep.subr.mxu0 0.0
      %463 = vmatpush1.msra.mxu0 0.0
      %464 = vmatprep.subr.mxu0 0.0
      %465 = vmatpush1.msra.mxu0 0.0
      %466 = vmatprep.subr.mxu0 0.0
      %467 = vmatpush1.msra.mxu0 0.0
      %468 = vmatprep.subr.mxu0 0.0
      %469 = vmatpush1.msra.mxu0 0.0
      %470 = vmatprep.subr.mxu0 0.0
      %471 = vmatpush1.msra.mxu0 0.0
      %472 = vmatprep.subr.mxu0 0.0
      %473 = vmatpush1.msra.mxu0 0.0
      %474 = vmatprep.subr.mxu0 0.0
      %475 = vmatpush1.msra.mxu0 0.0
      %476 = vmatprep.subr.mxu0 0.0
      %477 = vmatpush1.msra.mxu0 0.0
      %478 = vmatprep.subr.mxu0 0.0
      %479 = vmatpush1.msra.mxu0 0.0
      %480 = vmatprep.subr.mxu0 0.0
      %481 = vmatpush1.msra.mxu0 0.0
      %482 = vmatprep.subr.mxu0 0.0
      %483 = vmatpush1.msra.mxu0 0.0
      %484 = vmatprep.subr.mxu0 0.0
      %485 = vmatpush1.msra.mxu0 0.0
      %486 = vmatprep.subr.mxu0 0.0
      %487 = vmatpush1.msra.mxu0 0.0
      %488 = vmatprep.subr.mxu0 0.0
      %489 = vmatpush1.msra.mxu0 0.0
      %490 = vmatprep.subr.mxu0 0.0
      %491 = vmatpush1.msra.mxu0 0.0
      %492 = vmatprep.subr.mxu0 0.0
      %493 = vmatpush1.msra.mxu0 0.0
      %494 = vmatprep.subr.mxu0 0.0
      %495 = vmatpush1.msra.mxu0 0.0
      %496 = vmatprep.subr.mxu0 0.0
      %497 = vmatpush1.msra.mxu0 0.0
      %498 = vmatprep.subr.mxu0 0.0
      %499 = vmatpush1.msra.mxu0 0.0
      %500 = vmatprep.subr.mxu0 0.0
      %501 = vmatpush1.msra.mxu0 0.0
      %502 = vmatprep.subr.mxu0 0.0
      %503 = vmatpush1.msra.mxu0 0.0
      %504 = vmatprep.subr.mxu0 0.0
      %505 = vmatpush1.msra.mxu0 0.0
      %506 = vmatprep.subr.mxu0 0.0
      %507 = vmatpush1.msra.mxu0 0.0
      %508 = vmatprep.subr.mxu0 0.0
      %509 = vmatpush1.msra.mxu0 0.0
      %510 = vmatprep.mubr.f32.mxu0 0.0
      %511 = vmatmul.mubr.f32.gmra.mrb[0].mxu0 %v444
      %v512 = vpop.f32.mrb[0].mxu0
      %v513 = vadd.f32 0.0, %v512
      %v514 = vpop.f32.mrb[0].mxu0
      %515 = vdwg.mxu0
      %v516 = vadd.f32 %v442, %v513
      %517 = vst.msk [vmem:[#allocation4] sm:$0xff] %vm335, %v516
      %518 = vst.msk [vmem:[#allocation2] sm:$0xff] %vm434, %v417
      %519 = vrot.lane.b32.xlu0 %v332, 120
      %v520 = vpop.permute.xlu0 %519
      %521 = vrot.lane.b32.xlu0 %v333, 120
      %v522 = vpop.permute.xlu0 %521
      %v523 = vsel %vm335, %v520, 0
      %v525 = vsel %vm335, %v522, 0
      %527 = vmatprep.subr.mxu0 0.0
      %528 = vmatpush1.xpose.msra.mxu0 %v525
      %529 = vmatprep.subr.mxu0 0.0
      %530 = vmatpush1.xpose.msra.mxu0 0.0
      %531 = vmatprep.subr.mxu0 0.0
      %532 = vmatpush1.xpose.msra.mxu0 0.0
      %533 = vmatprep.subr.mxu0 0.0
      %534 = vmatpush1.xpose.msra.mxu0 0.0
      %535 = vmatprep.subr.mxu0 0.0
      %536 = vmatpush1.xpose.msra.mxu0 0.0
      %537 = vmatprep.subr.mxu0 0.0
      %538 = vmatpush1.xpose.msra.mxu0 0.0
      %539 = vmatprep.subr.mxu0 0.0
      %540 = vmatpush1.xpose.msra.mxu0 0.0
      %541 = vmatprep.subr.mxu0 0.0
      %542 = vmatpush1.xpose.msra.mxu0 0.0
      %543 = vmatprep.subr.mxu0 0.0
      %544 = vmatpush1.xpose.msra.mxu0 0.0
      %545 = vmatprep.subr.mxu0 0.0
      %546 = vmatpush1.xpose.msra.mxu0 0.0
      %547 = vmatprep.subr.mxu0 0.0
      %548 = vmatpush1.xpose.msra.mxu0 0.0
      %549 = vmatprep.subr.mxu0 0.0
      %550 = vmatpush1.xpose.msra.mxu0 0.0
      %551 = vmatprep.subr.mxu0 0.0
      %552 = vmatpush1.xpose.msra.mxu0 0.0
      %553 = vmatprep.subr.mxu0 0.0
      %554 = vmatpush1.xpose.msra.mxu0 0.0
      %555 = vmatprep.subr.mxu0 0.0
      %556 = vmatpush1.xpose.msra.mxu0 0.0
      %557 = vmatprep.subr.mxu0 0.0
      %558 = vmatpush1.xpose.msra.mxu0 0.0
      %559 = vmatprep.subr.mxu0 0.0
      %560 = vmatpush1.xpose.msra.mxu0 0.0
      %561 = vmatprep.subr.mxu0 0.0
      %562 = vmatpush1.xpose.msra.mxu0 0.0
      %563 = vmatprep.subr.mxu0 0.0
      %564 = vmatpush1.xpose.msra.mxu0 0.0
      %565 = vmatprep.subr.mxu0 0.0
      %566 = vmatpush1.xpose.msra.mxu0 0.0
      %567 = vmatprep.subr.mxu0 0.0
      %568 = vmatpush1.xpose.msra.mxu0 0.0
      %569 = vmatprep.subr.mxu0 0.0
      %570 = vmatpush1.xpose.msra.mxu0 0.0
      %571 = vmatprep.subr.mxu0 0.0
      %572 = vmatpush1.xpose.msra.mxu0 0.0
      %573 = vmatprep.subr.mxu0 0.0
      %574 = vmatpush1.xpose.msra.mxu0 0.0
      %575 = vmatprep.subr.mxu0 0.0
      %576 = vmatpush1.xpose.msra.mxu0 0.0
      %577 = vmatprep.subr.mxu0 0.0
      %578 = vmatpush1.xpose.msra.mxu0 0.0
      %579 = vmatprep.subr.mxu0 0.0
      %580 = vmatpush1.xpose.msra.mxu0 0.0
      %581 = vmatprep.subr.mxu0 0.0
      %582 = vmatpush1.xpose.msra.mxu0 0.0
      %583 = vmatprep.subr.mxu0 0.0
      %584 = vmatpush1.xpose.msra.mxu0 0.0
      %585 = vmatprep.subr.mxu0 0.0
      %586 = vmatpush1.xpose.msra.mxu0 0.0
      %587 = vmatprep.subr.mxu0 0.0
      %588 = vmatpush1.xpose.msra.mxu0 0.0
      %589 = vmatprep.subr.mxu0 0.0
      %590 = vmatpush1.xpose.msra.mxu0 0.0
      %591 = vmatprep.mubr.f32.mxu0 0.0
      %592 = vmatmul.mubr.f32.gmra.mrb[0].mxu0 %v523
      %v593 = vpop.f32.mrb[0].mxu0
      %v594 = vadd.f32 0.0, %v593
      %v595 = vpop.f32.mrb[0].mxu0
      %596 = vdwg.mxu0
      %s597 = scalar_lea.vmem [#allocation2], 8
      %v598 = vld [vmem:[%s597] sm:$0xff]
      %s599 = scalar_lea.vmem [#allocation3], 8
      %v600 = vld [vmem:[%s599] sm:$0xff]
      %v601 = vsel %vm335, %v594, -inf
      %602 = vmax.xlane.f32.xlu0 %v601
      %v603 = vpop.xlane.xlu0 %602
      %v604 = vmax.f32 %v598, %v603
      %v605 = vsub.f32 %v598, %v604
      %v606 = vmul.f32 %v605, 1.442695
      %v607 = vpow.pop %v606
      %609 = vset.pattern.permute.xlu0 0
      %610 = vperm.xlu0 %609, %v604
      %v611 = vpop.permute.xlu0 %610
      %v613 = vsub.f32 %v594, %v611
      %v614 = vmul.f32 %v613, 1.442695
      %v615 = vpow.pop %v614
      %v616 = vmul.f32 %v607, %v600
      %v617 = vsel %vm335, %v615, 0.0
      %618 = vadd.xlane.f32.xlu0 %v617
      %v619 = vpop.xlane.xlu0 %618
      %v620 = vadd.f32 %v616, %v619
      %621 = vst.msk [vmem:[%s599] sm:$0xff] %vm434, %v620
      %s622 = scalar_lea.vmem [#allocation4], 8
      %v623 = vld [vmem:[%s622] sm:$0xff]
      %625 = vset.pattern.permute.xlu0 0
      %626 = vperm.xlu0 %625, %v607
      %v627 = vpop.permute.xlu0 %626
      %v629 = vmul.f32 %v627, %v623
      %631 = vrot.lane.b32.xlu0 %v334, 120
      %v632 = vpop.permute.xlu0 %631
      %v635 = vsel %vm335, %v615, 0
      %637 = vmatprep.subr.mxu0 0.0
      %638 = vmatpush1.msra.mxu0 %v632
      %639 = vmatprep.subr.mxu0 0.0
      %640 = vmatpush1.msra.mxu0 0.0
      %641 = vmatprep.subr.mxu0 0.0
      %642 = vmatpush1.msra.mxu0 0.0
      %643 = vmatprep.subr.mxu0 0.0
      %644 = vmatpush1.msra.mxu0 0.0
      %645 = vmatprep.subr.mxu0 0.0
      %646 = vmatpush1.msra.mxu0 0.0
      %647 = vmatprep.subr.mxu0 0.0
      %648 = vmatpush1.msra.mxu0 0.0
      %649 = vmatprep.subr.mxu0 0.0
      %650 = vmatpush1.msra.mxu0 0.0
      %651 = vmatprep.subr.mxu0 0.0
      %652 = vmatpush1.msra.mxu0 0.0
      %653 = vmatprep.subr.mxu0 0.0
      %654 = vmatpush1.msra.mxu0 0.0
      %655 = vmatprep.subr.mxu0 0.0
      %656 = vmatpush1.msra.mxu0 0.0
      %657 = vmatprep.subr.mxu0 0.0
      %658 = vmatpush1.msra.mxu0 0.0
      %659 = vmatprep.subr.mxu0 0.0
      %660 = vmatpush1.msra.mxu0 0.0
      %661 = vmatprep.subr.mxu0 0.0
      %662 = vmatpush1.msra.mxu0 0.0
      %663 = vmatprep.subr.mxu0 0.0
      %664 = vmatpush1.msra.mxu0 0.0
      %665 = vmatprep.subr.mxu0 0.0
      %666 = vmatpush1.msra.mxu0 0.0
      %667 = vmatprep.subr.mxu0 0.0
      %668 = vmatpush1.msra.mxu0 0.0
      %669 = vmatprep.subr.mxu0 0.0
      %670 = vmatpush1.msra.mxu0 0.0
      %671 = vmatprep.subr.mxu0 0.0
      %672 = vmatpush1.msra.mxu0 0.0
      %673 = vmatprep.subr.mxu0 0.0
      %674 = vmatpush1.msra.mxu0 0.0
      %675 = vmatprep.subr.mxu0 0.0
      %676 = vmatpush1.msra.mxu0 0.0
      %677 = vmatprep.subr.mxu0 0.0
      %678 = vmatpush1.msra.mxu0 0.0
      %679 = vmatprep.subr.mxu0 0.0
      %680 = vmatpush1.msra.mxu0 0.0
      %681 = vmatprep.subr.mxu0 0.0
      %682 = vmatpush1.msra.mxu0 0.0
      %683 = vmatprep.subr.mxu0 0.0
      %684 = vmatpush1.msra.mxu0 0.0
      %685 = vmatprep.subr.mxu0 0.0
      %686 = vmatpush1.msra.mxu0 0.0
      %687 = vmatprep.subr.mxu0 0.0
      %688 = vmatpush1.msra.mxu0 0.0
      %689 = vmatprep.subr.mxu0 0.0
      %690 = vmatpush1.msra.mxu0 0.0
      %691 = vmatprep.subr.mxu0 0.0
      %692 = vmatpush1.msra.mxu0 0.0
      %693 = vmatprep.subr.mxu0 0.0
      %694 = vmatpush1.msra.mxu0 0.0
      %695 = vmatprep.subr.mxu0 0.0
      %696 = vmatpush1.msra.mxu0 0.0
      %697 = vmatprep.subr.mxu0 0.0
      %698 = vmatpush1.msra.mxu0 0.0
      %699 = vmatprep.subr.mxu0 0.0
      %700 = vmatpush1.msra.mxu0 0.0
      %701 = vmatprep.mubr.f32.mxu0 0.0
      %702 = vmatmul.mubr.f32.gmra.mrb[0].mxu0 %v635
      %v703 = vpop.f32.mrb[0].mxu0
      %v704 = vadd.f32 0.0, %v703
      %v705 = vpop.f32.mrb[0].mxu0
      %706 = vdwg.mxu0
      %v707 = vadd.f32 %v629, %v704
      %708 = vst.msk [vmem:[%s622] sm:$0xff] %vm335, %v707
      %709 = vst.msk [vmem:[%s597] sm:$0xff] %vm434, %v604
      %710 = vrot.lane.b32.xlu0 %v332, 112
      %v711 = vpop.permute.xlu0 %710
      %712 = vrot.lane.b32.xlu0 %v333, 112
      %v713 = vpop.permute.xlu0 %712
      %v714 = vsel %vm335, %v711, 0
      %v716 = vsel %vm335, %v713, 0
      %718 = vmatprep.subr.mxu0 0.0
      %719 = vmatpush1.xpose.msra.mxu0 %v716
      %720 = vmatprep.subr.mxu0 0.0
      %721 = vmatpush1.xpose.msra.mxu0 0.0
      %722 = vmatprep.subr.mxu0 0.0
      %723 = vmatpush1.xpose.msra.mxu0 0.0
      %724 = vmatprep.subr.mxu0 0.0
      %725 = vmatpush1.xpose.msra.mxu0 0.0
      %726 = vmatprep.subr.mxu0 0.0
      %727 = vmatpush1.xpose.msra.mxu0 0.0
      %728 = vmatprep.subr.mxu0 0.0
      %729 = vmatpush1.xpose.msra.mxu0 0.0
      %730 = vmatprep.subr.mxu0 0.0
      %731 = vmatpush1.xpose.msra.mxu0 0.0
      %732 = vmatprep.subr.mxu0 0.0
      %733 = vmatpush1.xpose.msra.mxu0 0.0
      %734 = vmatprep.subr.mxu0 0.0
      %735 = vmatpush1.xpose.msra.mxu0 0.0
      %736 = vmatprep.subr.mxu0 0.0
      %737 = vmatpush1.xpose.msra.mxu0 0.0
      %738 = vmatprep.subr.mxu0 0.0
      %739 = vmatpush1.xpose.msra.mxu0 0.0
      %740 = vmatprep.subr.mxu0 0.0
      %741 = vmatpush1.xpose.msra.mxu0 0.0
      %742 = vmatprep.subr.mxu0 0.0
      %743 = vmatpush1.xpose.msra.mxu0 0.0
      %744 = vmatprep.subr.mxu0 0.0
      %745 = vmatpush1.xpose.msra.mxu0 0.0
      %746 = vmatprep.subr.mxu0 0.0
      %747 = vmatpush1.xpose.msra.mxu0 0.0
      %748 = vmatprep.subr.mxu0 0.0
      %749 = vmatpush1.xpose.msra.mxu0 0.0
      %750 = vmatprep.subr.mxu0 0.0
      %751 = vmatpush1.xpose.msra.mxu0 0.0
      %752 = vmatprep.subr.mxu0 0.0
      %753 = vmatpush1.xpose.msra.mxu0 0.0
      %754 = vmatprep.subr.mxu0 0.0
      %755 = vmatpush1.xpose.msra.mxu0 0.0
      %756 = vmatprep.subr.mxu0 0.0
      %757 = vmatpush1.xpose.msra.mxu0 0.0
      %758 = vmatprep.subr.mxu0 0.0
      %759 = vmatpush1.xpose.msra.mxu0 0.0
      %760 = vmatprep.subr.mxu0 0.0
      %761 = vmatpush1.xpose.msra.mxu0 0.0
      %762 = vmatprep.subr.mxu0 0.0
      %763 = vmatpush1.xpose.msra.mxu0 0.0
      %764 = vmatprep.subr.mxu0 0.0
      %765 = vmatpush1.xpose.msra.mxu0 0.0
      %766 = vmatprep.subr.mxu0 0.0
      %767 = vmatpush1.xpose.msra.mxu0 0.0
      %768 = vmatprep.subr.mxu0 0.0
      %769 = vmatpush1.xpose.msra.mxu0 0.0
      %770 = vmatprep.subr.mxu0 0.0
      %771 = vmatpush1.xpose.msra.mxu0 0.0
      %772 = vmatprep.subr.mxu0 0.0
      %773 = vmatpush1.xpose.msra.mxu0 0.0
      %774 = vmatprep.subr.mxu0 0.0
      %775 = vmatpush1.xpose.msra.mxu0 0.0
      %776 = vmatprep.subr.mxu0 0.0
      %777 = vmatpush1.xpose.msra.mxu0 0.0
      %778 = vmatprep.subr.mxu0 0.0
      %779 = vmatpush1.xpose.msra.mxu0 0.0
      %780 = vmatprep.subr.mxu0 0.0
      %781 = vmatpush1.xpose.msra.mxu0 0.0
      %782 = vmatprep.mubr.f32.mxu0 0.0
      %783 = vmatmul.mubr.f32.gmra.mrb[0].mxu0 %v714
      %v784 = vpop.f32.mrb[0].mxu0
      %v785 = vadd.f32 0.0, %v784
      %v786 = vpop.f32.mrb[0].mxu0
      %787 = vdwg.mxu0
      %s788 = scalar_lea.vmem [#allocation2], 16
      %v789 = vld [vmem:[%s788] sm:$0xff]
      %s790 = scalar_lea.vmem [#allocation3], 16
      %v791 = vld [vmem:[%s790] sm:$0xff]
      %v792 = vsel %vm335, %v785, -inf
      %793 = vmax.xlane.f32.xlu0 %v792
      %v794 = vpop.xlane.xlu0 %793
      %v795 = vmax.f32 %v789, %v794
      %v796 = vsub.f32 %v789, %v795
      %v797 = vmul.f32 %v796, 1.442695
      %v798 = vpow.pop %v797
      %800 = vset.pattern.permute.xlu0 0
      %801 = vperm.xlu0 %800, %v795
      %v802 = vpop.permute.xlu0 %801
      %v804 = vsub.f32 %v785, %v802
      %v805 = vmul.f32 %v804, 1.442695
      %v806 = vpow.pop %v805
      %v807 = vmul.f32 %v798, %v791
      %v808 = vsel %vm335, %v806, 0.0
      %809 = vadd.xlane.f32.xlu0 %v808
      %v810 = vpop.xlane.xlu0 %809
      %v811 = vadd.f32 %v807, %v810
      %812 = vst.msk [vmem:[%s790] sm:$0xff] %vm434, %v811
      %s813 = scalar_lea.vmem [#allocation4], 16
      %v814 = vld [vmem:[%s813] sm:$0xff]
      %816 = vset.pattern.permute.xlu0 0
      %817 = vperm.xlu0 %816, %v798
      %v818 = vpop.permute.xlu0 %817
      %v820 = vmul.f32 %v818, %v814
      %821 = vrot.lane.b32.xlu0 %v334, 112
      %v822 = vpop.permute.xlu0 %821
      %v825 = vsel %vm335, %v806, 0
      %827 = vmatprep.subr.mxu0 0.0
      %828 = vmatpush1.msra.mxu0 %v822
      %829 = vmatprep.subr.mxu0 0.0
      %830 = vmatpush1.msra.mxu0 0.0
      %831 = vmatprep.subr.mxu0 0.0
      %832 = vmatpush1.msra.mxu0 0.0
      %833 = vmatprep.subr.mxu0 0.0
      %834 = vmatpush1.msra.mxu0 0.0
      %835 = vmatprep.subr.mxu0 0.0
      %836 = vmatpush1.msra.mxu0 0.0
      %837 = vmatprep.subr.mxu0 0.0
      %838 = vmatpush1.msra.mxu0 0.0
      %839 = vmatprep.subr.mxu0 0.0
      %840 = vmatpush1.msra.mxu0 0.0
      %841 = vmatprep.subr.mxu0 0.0
      %842 = vmatpush1.msra.mxu0 0.0
      %843 = vmatprep.subr.mxu0 0.0
      %844 = vmatpush1.msra.mxu0 0.0
      %845 = vmatprep.subr.mxu0 0.0
      %846 = vmatpush1.msra.mxu0 0.0
      %847 = vmatprep.subr.mxu0 0.0
      %848 = vmatpush1.msra.mxu0 0.0
      %849 = vmatprep.subr.mxu0 0.0
      %850 = vmatpush1.msra.mxu0 0.0
      %851 = vmatprep.subr.mxu0 0.0
      %852 = vmatpush1.msra.mxu0 0.0
      %853 = vmatprep.subr.mxu0 0.0
      %854 = vmatpush1.msra.mxu0 0.0
      %855 = vmatprep.subr.mxu0 0.0
      %856 = vmatpush1.msra.mxu0 0.0
      %857 = vmatprep.subr.mxu0 0.0
      %858 = vmatpush1.msra.mxu0 0.0
      %859 = vmatprep.subr.mxu0 0.0
      %860 = vmatpush1.msra.mxu0 0.0
      %861 = vmatprep.subr.mxu0 0.0
      %862 = vmatpush1.msra.mxu0 0.0
      %863 = vmatprep.subr.mxu0 0.0
      %864 = vmatpush1.msra.mxu0 0.0
      %865 = vmatprep.subr.mxu0 0.0
      %866 = vmatpush1.msra.mxu0 0.0
      %867 = vmatprep.subr.mxu0 0.0
      %868 = vmatpush1.msra.mxu0 0.0
      %869 = vmatprep.subr.mxu0 0.0
      %870 = vmatpush1.msra.mxu0 0.0
      %871 = vmatprep.subr.mxu0 0.0
      %872 = vmatpush1.msra.mxu0 0.0
      %873 = vmatprep.subr.mxu0 0.0
      %874 = vmatpush1.msra.mxu0 0.0
      %875 = vmatprep.subr.mxu0 0.0
      %876 = vmatpush1.msra.mxu0 0.0
      %877 = vmatprep.subr.mxu0 0.0
      %878 = vmatpush1.msra.mxu0 0.0
      %879 = vmatprep.subr.mxu0 0.0
      %880 = vmatpush1.msra.mxu0 0.0
      %881 = vmatprep.subr.mxu0 0.0
      %882 = vmatpush1.msra.mxu0 0.0
      %883 = vmatprep.subr.mxu0 0.0
      %884 = vmatpush1.msra.mxu0 0.0
      %885 = vmatprep.subr.mxu0 0.0
      %886 = vmatpush1.msra.mxu0 0.0
      %887 = vmatprep.subr.mxu0 0.0
      %888 = vmatpush1.msra.mxu0 0.0
      %889 = vmatprep.subr.mxu0 0.0
      %890 = vmatpush1.msra.mxu0 0.0
      %891 = vmatprep.mubr.f32.mxu0 0.0
      %892 = vmatmul.mubr.f32.gmra.mrb[0].mxu0 %v825
      %v893 = vpop.f32.mrb[0].mxu0
      %v894 = vadd.f32 0.0, %v893
      %v895 = vpop.f32.mrb[0].mxu0
      %896 = vdwg.mxu0
      %v897 = vadd.f32 %v820, %v894
      %898 = vst.msk [vmem:[%s813] sm:$0xff] %vm335, %v897
      %899 = vst.msk [vmem:[%s788] sm:$0xff] %vm434, %v795
      %900 = vrot.lane.b32.xlu0 %v332, 104
      %v901 = vpop.permute.xlu0 %900
      %902 = vrot.lane.b32.xlu0 %v333, 104
      %v903 = vpop.permute.xlu0 %902
      %v904 = vsel %vm335, %v901, 0
      %v906 = vsel %vm335, %v903, 0
      %908 = vmatprep.subr.mxu0 0.0
      %909 = vmatpush1.xpose.msra.mxu0 %v906
      %910 = vmatprep.subr.mxu0 0.0
      %911 = vmatpush1.xpose.msra.mxu0 0.0
      %912 = vmatprep.subr.mxu0 0.0
      %913 = vmatpush1.xpose.msra.mxu0 0.0
      %914 = vmatprep.subr.mxu0 0.0
      %915 = vmatpush1.xpose.msra.mxu0 0.0
      %916 = vmatprep.subr.mxu0 0.0
      %917 = vmatpush1.xpose.msra.mxu0 0.0
      %918 = vmatprep.subr.mxu0 0.0
      %919 = vmatpush1.xpose.msra.mxu0 0.0
      %920 = vmatprep.subr.mxu0 0.0
      %921 = vmatpush1.xpose.msra.mxu0 0.0
      %922 = vmatprep.subr.mxu0 0.0
      %923 = vmatpush1.xpose.msra.mxu0 0.0
      %924 = vmatprep.subr.mxu0 0.0
      %925 = vmatpush1.xpose.msra.mxu0 0.0
      %926 = vmatprep.subr.mxu0 0.0
      %927 = vmatpush1.xpose.msra.mxu0 0.0
      %928 = vmatprep.subr.mxu0 0.0
      %929 = vmatpush1.xpose.msra.mxu0 0.0
      %930 = vmatprep.subr.mxu0 0.0
      %931 = vmatpush1.xpose.msra.mxu0 0.0
      %932 = vmatprep.subr.mxu0 0.0
      %933 = vmatpush1.xpose.msra.mxu0 0.0
      %934 = vmatprep.subr.mxu0 0.0
      %935 = vmatpush1.xpose.msra.mxu0 0.0
      %936 = vmatprep.subr.mxu0 0.0
      %937 = vmatpush1.xpose.msra.mxu0 0.0
      %938 = vmatprep.subr.mxu0 0.0
      %939 = vmatpush1.xpose.msra.mxu0 0.0
      %940 = vmatprep.subr.mxu0 0.0
      %941 = vmatpush1.xpose.msra.mxu0 0.0
      %942 = vmatprep.subr.mxu0 0.0
      %943 = vmatpush1.xpose.msra.mxu0 0.0
      %944 = vmatprep.subr.mxu0 0.0
      %945 = vmatpush1.xpose.msra.mxu0 0.0
      %946 = vmatprep.subr.mxu0 0.0
      %947 = vmatpush1.xpose.msra.mxu0 0.0
      %948 = vmatprep.subr.mxu0 0.0
      %949 = vmatpush1.xpose.msra.mxu0 0.0
      %950 = vmatprep.subr.mxu0 0.0
      %951 = vmatpush1.xpose.msra.mxu0 0.0
      %952 = vmatprep.subr.mxu0 0.0
      %953 = vmatpush1.xpose.msra.mxu0 0.0
      %954 = vmatprep.subr.mxu0 0.0
      %955 = vmatpush1.xpose.msra.mxu0 0.0
      %956 = vmatprep.subr.mxu0 0.0
      %957 = vmatpush1.xpose.msra.mxu0 0.0
      %958 = vmatprep.subr.mxu0 0.0
      %959 = vmatpush1.xpose.msra.mxu0 0.0
      %960 = vmatprep.subr.mxu0 0.0
      %961 = vmatpush1.xpose.msra.mxu0 0.0
      %962 = vmatprep.subr.mxu0 0.0
      %963 = vmatpush1.xpose.msra.mxu0 0.0
      %964 = vmatprep.subr.mxu0 0.0
      %965 = vmatpush1.xpose.msra.mxu0 0.0
      %966 = vmatprep.subr.mxu0 0.0
      %967 = vmatpush1.xpose.msra.mxu0 0.0
      %968 = vmatprep.subr.mxu0 0.0
      %969 = vmatpush1.xpose.msra.mxu0 0.0
      %970 = vmatprep.subr.mxu0 0.0
      %971 = vmatpush1.xpose.msra.mxu0 0.0
      %972 = vmatprep.mubr.f32.mxu0 0.0
      %973 = vmatmul.mubr.f32.gmra.mrb[0].mxu0 %v904
      %v974 = vpop.f32.mrb[0].mxu0
      %v975 = vadd.f32 0.0, %v974
      %v976 = vpop.f32.mrb[0].mxu0
      %977 = vdwg.mxu0
      %s978 = scalar_lea.vmem [#allocation2], 24
      %v979 = vld [vmem:[%s978] sm:$0xff]
      %s980 = scalar_lea.vmem [#allocation3], 24
      %v981 = vld [vmem:[%s980] sm:$0xff]
      %v982 = vsel %vm335, %v975, -inf
      %983 = vmax.xlane.f32.xlu0 %v982
      %v984 = vpop.xlane.xlu0 %983
      %v985 = vmax.f32 %v979, %v984
      %v986 = vsub.f32 %v979, %v985
      %v987 = vmul.f32 %v986, 1.442695
      %v988 = vpow.pop %v987
      %990 = vset.pattern.permute.xlu0 0
      %991 = vperm.xlu0 %990, %v985
      %v992 = vpop.permute.xlu0 %991
      %v994 = vsub.f32 %v975, %v992
      %v995 = vmul.f32 %v994, 1.442695
      %v996 = vpow.pop %v995
      %v997 = vmul.f32 %v988, %v981
      %v998 = vsel %vm335, %v996, 0.0
      %999 = vadd.xlane.f32.xlu0 %v998
      %v1000 = vpop.xlane.xlu0 %999
      %v1001 = vadd.f32 %v997, %v1000
      %1002 = vst.msk [vmem:[%s980] sm:$0xff] %vm434, %v1001
      %s1003 = scalar_lea.vmem [#allocation4], 24
      %v1004 = vld [vmem:[%s1003] sm:$0xff]
      %1006 = vset.pattern.permute.xlu0 0
      %1007 = vperm.xlu0 %1006, %v988
      %v1008 = vpop.permute.xlu0 %1007
      %v1010 = vmul.f32 %v1008, %v1004
      %1011 = vrot.lane.b32.xlu0 %v334, 104
      %v1012 = vpop.permute.xlu0 %1011
      %v1015 = vsel %vm335, %v996, 0
      %1017 = vmatprep.subr.mxu0 0.0
      %1018 = vmatpush1.msra.mxu0 %v1012
      %1019 = vmatprep.subr.mxu0 0.0
      %1020 = vmatpush1.msra.mxu0 0.0
      %1021 = vmatprep.subr.mxu0 0.0
      %1022 = vmatpush1.msra.mxu0 0.0
      %1023 = vmatprep.subr.mxu0 0.0
      %1024 = vmatpush1.msra.mxu0 0.0
      %1025 = vmatprep.subr.mxu0 0.0
      %1026 = vmatpush1.msra.mxu0 0.0
      %1027 = vmatprep.subr.mxu0 0.0
      %1028 = vmatpush1.msra.mxu0 0.0
      %1029 = vmatprep.subr.mxu0 0.0
      %1030 = vmatpush1.msra.mxu0 0.0
      %1031 = vmatprep.subr.mxu0 0.0
      %1032 = vmatpush1.msra.mxu0 0.0
      %1033 = vmatprep.subr.mxu0 0.0
      %1034 = vmatpush1.msra.mxu0 0.0
      %1035 = vmatprep.subr.mxu0 0.0
      %1036 = vmatpush1.msra.mxu0 0.0
      %1037 = vmatprep.subr.mxu0 0.0
      %1038 = vmatpush1.msra.mxu0 0.0
      %1039 = vmatprep.subr.mxu0 0.0
      %1040 = vmatpush1.msra.mxu0 0.0
      %1041 = vmatprep.subr.mxu0 0.0
      %1042 = vmatpush1.msra.mxu0 0.0
      %1043 = vmatprep.subr.mxu0 0.0
      %1044 = vmatpush1.msra.mxu0 0.0
      %1045 = vmatprep.subr.mxu0 0.0
      %1046 = vmatpush1.msra.mxu0 0.0
      %1047 = vmatprep.subr.mxu0 0.0
      %1048 = vmatpush1.msra.mxu0 0.0
      %1049 = vmatprep.subr.mxu0 0.0
      %1050 = vmatpush1.msra.mxu0 0.0
      %1051 = vmatprep.subr.mxu0 0.0
      %1052 = vmatpush1.msra.mxu0 0.0
      %1053 = vmatprep.subr.mxu0 0.0
      %1054 = vmatpush1.msra.mxu0 0.0
      %1055 = vmatprep.subr.mxu0 0.0
      %1056 = vmatpush1.msra.mxu0 0.0
      %1057 = vmatprep.subr.mxu0 0.0
      %1058 = vmatpush1.msra.mxu0 0.0
      %1059 = vmatprep.subr.mxu0 0.0
      %1060 = vmatpush1.msra.mxu0 0.0
      %1061 = vmatprep.subr.mxu0 0.0
      %1062 = vmatpush1.msra.mxu0 0.0
      %1063 = vmatprep.subr.mxu0 0.0
      %1064 = vmatpush1.msra.mxu0 0.0
      %1065 = vmatprep.subr.mxu0 0.0
      %1066 = vmatpush1.msra.mxu0 0.0
      %1067 = vmatprep.subr.mxu0 0.0
      %1068 = vmatpush1.msra.mxu0 0.0
      %1069 = vmatprep.subr.mxu0 0.0
      %1070 = vmatpush1.msra.mxu0 0.0
      %1071 = vmatprep.subr.mxu0 0.0
      %1072 = vmatpush1.msra.mxu0 0.0
      %1073 = vmatprep.subr.mxu0 0.0
      %1074 = vmatpush1.msra.mxu0 0.0
      %1075 = vmatprep.subr.mxu0 0.0
      %1076 = vmatpush1.msra.mxu0 0.0
      %1077 = vmatprep.subr.mxu0 0.0
      %1078 = vmatpush1.msra.mxu0 0.0
      %1079 = vmatprep.subr.mxu0 0.0
      %1080 = vmatpush1.msra.mxu0 0.0
      %1081 = vmatprep.mubr.f32.mxu0 0.0
      %1082 = vmatmul.mubr.f32.gmra.mrb[0].mxu0 %v1015
      %v1083 = vpop.f32.mrb[0].mxu0
      %v1084 = vadd.f32 0.0, %v1083
      %v1085 = vpop.f32.mrb[0].mxu0
      %1086 = vdwg.mxu0
      %v1087 = vadd.f32 %v1010, %v1084
      %1088 = vst.msk [vmem:[%s1003] sm:$0xff] %vm335, %v1087
      %1089 = vst.msk [vmem:[%s978] sm:$0xff] %vm434, %v985
      // Predicated region
      $region45: #{attention_layer_forward.3} parent=39 // pred_check
        %p1090 = pneg %p314
      $region46: #{attention_layer_forward.3} parent=39 // pred_check_branch
        %1092 = sbr.rel (%p1090) target = $region48
      $region47: #{attention_layer_forward.3} parent=39 // pred_region
        %v1093 = vld [vmem:[#allocation3] sm:$0xff]
        %v1094 = vrcp.pop %v1093
        %v1095 = vld [vmem:[#allocation4] sm:$0xff]
        %1097 = vset.pattern.permute.xlu0 0
        %1098 = vperm.xlu0 %1097, %v1094
        %v1099 = vpop.permute.xlu0 %1098
        %v1101 = vmul.f32 %v1095, %v1099
        %v1102 = vld [vmem:[%s599] sm:$0xff]
        %v1103 = vrcp.pop %v1102
        %v1104 = vld [vmem:[%s622] sm:$0xff]
        %1106 = vset.pattern.permute.xlu0 0
        %1107 = vperm.xlu0 %1106, %v1103
        %v1108 = vpop.permute.xlu0 %1107
        %v1110 = vmul.f32 %v1104, %v1108
        %v1111 = vld [vmem:[%s790] sm:$0xff]
        %v1112 = vrcp.pop %v1111
        %v1113 = vld [vmem:[%s813] sm:$0xff]
        %1115 = vset.pattern.permute.xlu0 0
        %1116 = vperm.xlu0 %1115, %v1112
        %v1117 = vpop.permute.xlu0 %1116
        %v1119 = vmul.f32 %v1113, %v1117
        %v1120 = vld [vmem:[%s980] sm:$0xff]
        %v1121 = vrcp.pop %v1120
        %v1122 = vld [vmem:[%s1003] sm:$0xff]
        %1124 = vset.pattern.permute.xlu0 0
        %1125 = vperm.xlu0 %1124, %v1121
        %v1126 = vpop.permute.xlu0 %1125
        %v1128 = vmul.f32 %v1122, %v1126
        %1130 = vrot.lane.b32.xlu0 %v1110, 8
        %v1131 = vpop.permute.xlu0 %1130
        %1134 = vrot.lane.b32.xlu0 %v1119, 16
        %v1135 = vpop.permute.xlu0 %1134
        %1138 = vrot.lane.b32.xlu0 %v1128, 24
        %v1139 = vpop.permute.xlu0 %1138
        %v1141 = vsel %vm335, %v1101, %v1131
        %vm1142 = vcmask 130048
        %v1143 = vsel %vm1142, %v1141, %v1135
        %vm1144 = vcmask 195584
        %v1145 = vsel %vm1144, %v1143, %v1139
        %v1146 = vld [vmem:[%s3] sm:$0xff]
        %v1147 = vld [vmem:[%s3 + $0x8] sm:$0xff]
        %v1148 = vld [vmem:[%s3 + $0x10] sm:$0xff]
        %v1149 = vld [vmem:[%s3 + $0x18] sm:$0xff]
        %v1150 = vld [vmem:[%s4] sm:$0x1]
        %v1152 = vlaneseq
        %v1153 = vshrl.u32 %v1152, 7
        %v1154 = vsub.s32 0, %v1153
        %v1155 = vrot.slane %v1150, %v1154
        %vm1157 = vcmask 261120
        %v1159 = vsel %vm1157, %v1145, 0
        %1161 = vmatprep.subr.mxu0 0.0
        %1162 = vmatpush1.msra.mxu0 %v1146
        %1163 = vmatprep.subr.mxu0 0.0
        %1164 = vmatpush1.msra.mxu0 %v1147
        %1165 = vmatprep.subr.mxu0 0.0
        %1166 = vmatpush1.msra.mxu0 %v1148
        %1167 = vmatprep.subr.mxu0 0.0
        %1168 = vmatpush1.msra.mxu0 %v1149
        %1169 = vmatprep.subr.mxu0 0.0
        %1170 = vmatpush1.msra.mxu0 0.0
        %1171 = vmatprep.subr.mxu0 0.0
        %1172 = vmatpush1.msra.mxu0 0.0
        %1173 = vmatprep.subr.mxu0 0.0
        %1174 = vmatpush1.msra.mxu0 0.0
        %1175 = vmatprep.subr.mxu0 0.0
        %1176 = vmatpush1.msra.mxu0 0.0
        %1177 = vmatprep.subr.mxu0 0.0
        %1178 = vmatpush1.msra.mxu0 0.0
        %1179 = vmatprep.subr.mxu0 0.0
        %1180 = vmatpush1.msra.mxu0 0.0
        %1181 = vmatprep.subr.mxu0 0.0
        %1182 = vmatpush1.msra.mxu0 0.0
        %1183 = vmatprep.subr.mxu0 0.0
        %1184 = vmatpush1.msra.mxu0 0.0
        %1185 = vmatprep.subr.mxu0 0.0
        %1186 = vmatpush1.msra.mxu0 0.0
        %1187 = vmatprep.subr.mxu0 0.0
        %1188 = vmatpush1.msra.mxu0 0.0
        %1189 = vmatprep.subr.mxu0 0.0
        %1190 = vmatpush1.msra.mxu0 0.0
        %1191 = vmatprep.subr.mxu0 0.0
        %1192 = vmatpush1.msra.mxu0 0.0
        %1193 = vmatprep.subr.mxu0 0.0
        %1194 = vmatpush1.msra.mxu0 0.0
        %1195 = vmatprep.subr.mxu0 0.0
        %1196 = vmatpush1.msra.mxu0 0.0
        %1197 = vmatprep.subr.mxu0 0.0
        %1198 = vmatpush1.msra.mxu0 0.0
        %1199 = vmatprep.subr.mxu0 0.0
        %1200 = vmatpush1.msra.mxu0 0.0
        %1201 = vmatprep.subr.mxu0 0.0
        %1202 = vmatpush1.msra.mxu0 0.0
        %1203 = vmatprep.subr.mxu0 0.0
        %1204 = vmatpush1.msra.mxu0 0.0
        %1205 = vmatprep.subr.mxu0 0.0
        %1206 = vmatpush1.msra.mxu0 0.0
        %1207 = vmatprep.subr.mxu0 0.0
        %1208 = vmatpush1.msra.mxu0 0.0
        %1209 = vmatprep.subr.mxu0 0.0
        %1210 = vmatpush1.msra.mxu0 0.0
        %1211 = vmatprep.subr.mxu0 0.0
        %1212 = vmatpush1.msra.mxu0 0.0
        %1213 = vmatprep.subr.mxu0 0.0
        %1214 = vmatpush1.msra.mxu0 0.0
        %1215 = vmatprep.subr.mxu0 0.0
        %1216 = vmatpush1.msra.mxu0 0.0
        %1217 = vmatprep.subr.mxu0 0.0
        %1218 = vmatpush1.msra.mxu0 0.0
        %1219 = vmatprep.subr.mxu0 0.0
        %1220 = vmatpush1.msra.mxu0 0.0
        %1221 = vmatprep.subr.mxu0 0.0
        %1222 = vmatpush1.msra.mxu0 0.0
        %1223 = vmatprep.subr.mxu0 0.0
        %1224 = vmatpush1.msra.mxu0 0.0
        %1225 = vmatprep.mubr.f32.mxu0 0.0
        %1226 = vmatmul.mubr.f32.gmra.mrb[0].mxu0 %v1159
        %v1227 = vpop.f32.mrb[0].mxu0
        %v1228 = vadd.f32 %v1155, %v1227
        %v1229 = vpop.f32.mrb[0].mxu0
        %1230 = vdwg.mxu0
        %1231 = vst.msk [vmem:[%s313] sm:$0xff] %vm1157, %v1228
      $region48: #{attention_layer_forward.3} parent=39 // pred_fallthru
        _
      %p1232 = scmp.lt.s32.totalorder %s21, 1
      %s1233 = scalar_select %p1232, %s21, 1
      %p1234 = scmp.lt.s32.totalorder %s22, 0
      %s1235 = scalar_select %p1234, %s22, 0
      %s1236 = sadd.s32 %s1235, %s1233
      %s1237 = smul.addr %s1236, 8
      %s1238 = scalar_lea.vmem %s5, %s1237
      // Predicated region
      $region49: #{attention_layer_forward.3} parent=39 // pred_check
        %p1239 = pneg %p181
      $region50: #{attention_layer_forward.3} parent=39 // pred_check_branch
        %1241 = sbr.rel (%p1239) target = $region52
      $region51: #{attention_layer_forward.3} parent=39 // pred_region
        _
      $region52: #{attention_layer_forward.3} parent=39 // pred_fallthru
        _
    $region40: #{attention_layer_forward.3} parent=5 // pred_fallthru
      _
    %p1242 = scmp.le.s32.totalorder 2, %s11
    // Predicated region
    $region53: #{attention_layer_forward.3} parent=5 // pred_check
      %p1243 = pneg %p1242
    $region54: #{attention_layer_forward.3} parent=5 // pred_check_branch
      %1245 = sbr.rel (%p1243) target = $region56
    $region55: #{attention_layer_forward.3} parent=5 // pred_region
      %s1246 = ssub.s32 %s11, 2
      // Predicated region
      $region57: #{attention_layer_forward.3} parent=55 // pred_check
        %p1247 = pneg %p187
      $region58: #{attention_layer_forward.3} parent=55 // pred_check_branch
        %1249 = sbr.rel (%p1247) target = $region60
      $region59: #{attention_layer_forward.3} parent=55 // pred_region
        %p1250 = scmp.lt.s32.totalorder %s24, 1
        %s1251 = scalar_select %p1250, %s24, 1
        %p1252 = scmp.lt.s32.totalorder %s25, 0
        %s1253 = scalar_select %p1252, %s25, 0
        %s1254 = sadd.s32 %s1253, %s1251
        %s1255 = smul.addr %s1254, 8
        %s1256 = scalar_lea.vmem %s5, %s1255
      $region60: #{attention_layer_forward.3} parent=55 // pred_fallthru
        _
    $region56: #{attention_layer_forward.3} parent=5 // pred_fallthru
      _
  $region6: #{attention_layer_forward.3} parent=0 // loop_footer
    %s15 = sadd.s32 1, %s11
  $region7: #{attention_layer_forward.3} parent=0 // loop_footer_branch
    %10 = sbr.rel target = $region3
  $region8: #{attention_layer_forward.3} parent=0 // loop_exit
    _

</llo_original>
